<compile_context>
chip_gen: v7x
topology: tpu7x:2x2x1
jax: 0.10.0
libtpu: 0.0.40
codegen_flags: <defaults>
</compile_context>

<pallas_src>
import functools
import math

import jax
import jax.numpy as jnp
from jax.experimental import pallas as pl
from jax.experimental.pallas import tpu as pltpu


# ---------------------------------------------------------------------------
# hardware-adaptive configuration
# ---------------------------------------------------------------------------
def _hw_config():
    vmem = 64 * 1024 * 1024
    try:
        vmem = int(pltpu.get_tpu_info().vmem_capacity_bytes)
    except Exception:
        pass
    if vmem >= 96 * 1024 * 1024:
        # v5e / v6e: 128 MiB VMEM -> larger tiles, larger scoped limit.
        return dict(vmem_limit=100 * 1024 * 1024,
                    bs1=512, bn1=1536, bq=512, bk=2048, bs3=512, bn3=1536)
    # v7x (64 MiB VMEM) or unknown -> conservative plan.
    return dict(vmem_limit=48 * 1024 * 1024,
                bs1=256, bn1=768, bq=512, bk=1024, bs3=256, bn3=1024)


# ---------------------------------------------------------------------------
# tile-size helpers (lane/sublane friendly; collapse to full dims at small sizes)
# ---------------------------------------------------------------------------
def _largest_divisor_multiple(total, step, cap):
    n = (cap // step) * step
    while n >= step:
        if total % n == 0:
            return n
        n -= step
    return None


def _seq_block(s, cap):
    if s <= cap:
        return s
    n = _largest_divisor_multiple(s, 8, cap)
    return n if n is not None else s


def _qkv_col_block(d, hd, cap):
    # Column tile within one of the q/k/v d-wide slabs: must divide d, contain
    # whole heads and be lane aligned (multiple of 128) unless it equals d.
    if d % 128 != 0:
        return d
    step = (128 * hd) // math.gcd(128, hd)
    n = _largest_divisor_multiple(d, step, min(cap, d))
    return n if n is not None else d


def _col_block(d, cap):
    if d % 128 != 0 or d <= cap:
        return d
    n = _largest_divisor_multiple(d, 128, cap)
    return n if n is not None else d


def _pick_block_h(h, hd):
    # Heads per flash-attention step: smallest count that keeps the output
    # column slab lane-aligned; prefer >=2 for MXU occupancy; fall back to all
    # heads (output slab then equals the full hidden dim).
    valid = [bh for bh in range(1, h + 1)
             if h % bh == 0 and (bh * hd) % 128 == 0]
    if not valid:
        return h
    for bh in valid:
        if bh >= 2:
            return bh
    return valid[0]


# ---------------------------------------------------------------------------
# Stage 1: fused QKV projection + per-head LayerNorm + RoPE (head-major output)
# ---------------------------------------------------------------------------
def _qkv_proj_kernel(x_ref, w_ref, b_ref, g_ref, beta_ref, cos_ref, sin_ref,
                     rot_ref, o_ref, *, hd, eps):
    ti = pl.program_id(1)                       # 0 = q, 1 = k, 2 = v
    nh_t = o_ref.shape[1]                       # heads in this column tile

    x = x_ref[0]                                                    # (bs, d) bf16
    y = jnp.dot(x, w_ref[0], preferred_element_type=jnp.float32) + b_ref[0]

    @pl.when(ti == 2)
    def _():                                     # V columns: projection only
        yv = y.astype(o_ref.dtype)
        for j in range(nh_t):
            o_ref[0, j] = yv[:, j * hd:(j + 1) * hd]

    @pl.when(ti < 2)
    def _():                                     # Q/K columns: + LayerNorm + RoPE
        g = g_ref[0]                             # (1, block_n) f32 (q row has scale folded in)
        be = beta_ref[0]
        cs = cos_ref[...]                        # (bs, hd) f32
        sn = sin_ref[...]
        rot = rot_ref[...]                       # (hd, hd) bf16 rotate_half matrix
        for j in range(nh_t):
            lo = j * hd
            yj = y[:, lo:lo + hd]                                   # (bs, hd) f32
            mu = jnp.mean(yj, axis=-1, keepdims=True)
            xc = yj - mu
            var = jnp.mean(xc * xc, axis=-1, keepdims=True)
            zj = xc * jax.lax.rsqrt(var + eps) * g[:, lo:lo + hd] + be[:, lo:lo + hd]
            zr = jnp.dot(zj.astype(jnp.bfloat16), rot,
                         preferred_element_type=jnp.float32)
            o_ref[0, j] = (zj * cs + zr * sn).astype(o_ref.dtype)


# ---------------------------------------------------------------------------
# Stage 2: flash attention, block_h heads per step, online softmax
# ---------------------------------------------------------------------------
def _flash_attn_kernel(q_ref, k_ref, v_ref, o_ref, m_sc, l_sc, acc_sc):
    ki = pl.program_id(3)
    block_h = q_ref.shape[1]
    hd = q_ref.shape[3]

    @pl.when(ki == 0)
    def _():
        m_sc[...] = jnp.full(m_sc.shape, -jnp.inf, m_sc.dtype)
        l_sc[...] = jnp.zeros(l_sc.shape, l_sc.dtype)
        acc_sc[...] = jnp.zeros(acc_sc.shape, acc_sc.dtype)

    for j in range(block_h):
        q = q_ref[0, j]                                             # (tq, hd) bf16, pre-scaled
        k = k_ref[0, j]                                             # (tk, hd) bf16
        s = jax.lax.dot_general(q, k, (((1,), (1,)), ((), ())),
                                preferred_element_type=jnp.float32)  # (tq, tk)
        m_prev = m_sc[j]
        m_new = jnp.maximum(m_prev, jnp.max(s, axis=-1, keepdims=True))
        alpha = jnp.exp(m_prev - m_new)
        p = jnp.exp(s - m_new)
        l_sc[j] = alpha * l_sc[j] + jnp.sum(p, axis=-1, keepdims=True)
        acc_sc[j] = alpha * acc_sc[j] + jnp.dot(
            p.astype(v_ref.dtype), v_ref[0, j], preferred_element_type=jnp.float32)
        m_sc[j] = m_new

    @pl.when(ki == pl.num_programs(3) - 1)
    def _():
        for j in range(block_h):
            inv = pl.reciprocal(l_sc[j], approx=True)
            o_ref[0, :, j * hd:(j + 1) * hd] = (acc_sc[j] * inv).astype(o_ref.dtype)


# ---------------------------------------------------------------------------
# Stage 3: output projection (weight resident across the seq axis)
# ---------------------------------------------------------------------------
def _linear_kernel(x_ref, w_ref, b_ref, o_ref):
    o_ref[0] = (jnp.dot(x_ref[0], w_ref[...], preferred_element_type=jnp.float32)
                + b_ref[...]).astype(o_ref.dtype)


# ---------------------------------------------------------------------------
# Top-level forward
# ---------------------------------------------------------------------------
def self_attention_layer(x, params, cos, sin, *, num_heads):
    b, s, d = x.shape
    h = num_heads
    hd = d // h
    scale = 1.0 / math.sqrt(hd)
    f32, bf16 = jnp.float32, jnp.bfloat16
    cfg = _hw_config()

    block_s = _seq_block(s, cfg["bs1"])
    block_n = _qkv_col_block(d, hd, cfg["bn1"])
    nh_t = block_n // hd                       # heads per stage-1 column tile
    ngd = d // block_n                         # column groups per q/k/v slab
    block_q = _seq_block(s, cfg["bq"])
    block_k = _seq_block(s, cfg["bk"])
    block_h = _pick_block_h(h, hd)
    nqh = h // block_h
    block_s3 = _seq_block(s, cfg["bs3"])
    block_no = _col_block(d, cfg["bn3"])

    # --- host-side constant plumbing (tiny relative to activations) ---------
    w3 = params["wqkv"].reshape(d, 3, d).transpose(1, 0, 2).astype(bf16)  # (3,d,d)
    b3 = params["bqkv"].reshape(3, 1, d).astype(f32)
    # q row carries the 1/sqrt(hd) softmax scale folded into gamma/beta.
    g3 = jnp.stack([jnp.tile(params["qg"].astype(f32), h) * scale,
                    jnp.tile(params["kg"].astype(f32), h),
                    jnp.ones((d,), f32)]).reshape(3, 1, d)
    beta3 = jnp.stack([jnp.tile(params["qb"].astype(f32), h) * scale,
                       jnp.tile(params["kb"].astype(f32), h),
                       jnp.zeros((d,), f32)]).reshape(3, 1, d)
    cos_t = cos.astype(f32)                                         # (s, hd)
    sin_t = sin.astype(f32)
    idx = jnp.arange(0, hd, 2)
    rot = (jnp.zeros((hd, hd), f32).at[idx + 1, idx].set(-1.0)
                                    .at[idx, idx + 1].set(1.0)).astype(bf16)
    wo = params["wo"].astype(bf16)                                  # (d, d)
    bo = params["bo"].reshape(1, d).astype(f32)

    # --- stage 1: fused QKV + per-head LN + RoPE, head-major output ----------
    qkv4 = pl.pallas_call(
        functools.partial(_qkv_proj_kernel, hd=hd, eps=1e-6),
        out_shape=jax.ShapeDtypeStruct((b, 3 * h, s, hd), bf16),
        grid_spec=pltpu.PrefetchScalarGridSpec(
            num_scalar_prefetch=0,
            grid=(b, 3, ngd, s // block_s),
            in_specs=[
                pl.BlockSpec((1, block_s, d), lambda bi, ti, gi, si: (bi, si, 0)),   # x
                pl.BlockSpec((1, d, block_n), lambda bi, ti, gi, si: (ti, 0, gi)),   # W (resident)
                pl.BlockSpec((1, 1, block_n), lambda bi, ti, gi, si: (ti, 0, gi)),   # bias
                pl.BlockSpec((1, 1, block_n), lambda bi, ti, gi, si: (ti, 0, gi)),   # gamma
                pl.BlockSpec((1, 1, block_n), lambda bi, ti, gi, si: (ti, 0, gi)),   # beta
                pl.BlockSpec((block_s, hd), lambda bi, ti, gi, si: (si, 0)),         # cos
                pl.BlockSpec((block_s, hd), lambda bi, ti, gi, si: (si, 0)),         # sin
                pl.BlockSpec((hd, hd), lambda bi, ti, gi, si: (0, 0)),               # rotate_half
            ],
            out_specs=pl.BlockSpec(
                (1, nh_t, block_s, hd),
                lambda bi, ti, gi, si: (bi, ti * ngd + gi, si, 0)),
        ),
        compiler_params=pltpu.CompilerParams(
            dimension_semantics=("parallel", "parallel", "parallel", "arbitrary"),
            vmem_limit_bytes=cfg["vmem_limit"]),
    )(x.astype(bf16), w3, b3, g3, beta3, cos_t, sin_t, rot)

    # --- stage 2: flash attention; writes (b, s, h*hd) directly --------------
    ctx = pl.pallas_call(
        _flash_attn_kernel,
        out_shape=jax.ShapeDtypeStruct((b, s, d), bf16),
        grid_spec=pltpu.PrefetchScalarGridSpec(
            num_scalar_prefetch=0,
            grid=(b, nqh, s // block_q, s // block_k),
            in_specs=[
                pl.BlockSpec((1, block_h, block_q, hd),
                             lambda bi, hi, qi, ki: (bi, hi, qi, 0)),            # Q heads
                pl.BlockSpec((1, block_h, block_k, hd),
                             lambda bi, hi, qi, ki: (bi, nqh + hi, ki, 0)),      # K heads
                pl.BlockSpec((1, block_h, block_k, hd),
                             lambda bi, hi, qi, ki: (bi, 2 * nqh + hi, ki, 0)),  # V heads
            ],
            out_specs=pl.BlockSpec((1, block_q, block_h * hd),
                                   lambda bi, hi, qi, ki: (bi, qi, hi)),
            scratch_shapes=[pltpu.VMEM((block_h, block_q, 1), jnp.float32),   # running max
                            pltpu.VMEM((block_h, block_q, 1), jnp.float32),   # running sum
                            pltpu.VMEM((block_h, block_q, hd), jnp.float32)], # accumulator
        ),
        compiler_params=pltpu.CompilerParams(
            dimension_semantics=("parallel", "parallel", "parallel", "arbitrary"),
            vmem_limit_bytes=cfg["vmem_limit"]),
    )(qkv4, qkv4, qkv4)

    # --- stage 3: output projection (dropout is identity in eval mode) -------
    out = pl.pallas_call(
        _linear_kernel,
        out_shape=jax.ShapeDtypeStruct((b, s, d), x.dtype),
        grid_spec=pltpu.PrefetchScalarGridSpec(
            num_scalar_prefetch=0,
            grid=(b, d // block_no, s // block_s3),
            in_specs=[
                pl.BlockSpec((1, block_s3, d), lambda bi, ni, si: (bi, si, 0)),
                pl.BlockSpec((d, block_no), lambda bi, ni, si: (0, ni)),       # Wo (resident)
                pl.BlockSpec((1, block_no), lambda bi, ni, si: (0, ni)),
            ],
            out_specs=pl.BlockSpec((1, block_s3, block_no),
                                   lambda bi, ni, si: (bi, si, ni)),
        ),
        compiler_params=pltpu.CompilerParams(
            dimension_semantics=("parallel", "parallel", "arbitrary"),
            vmem_limit_bytes=cfg["vmem_limit"]),
    )(ctx, wo, bo)
    return out


# ---------------------------------------------------------------------------
# Pure-JAX reference (mirror of the PyTorch forward) for verification
# ---------------------------------------------------------------------------
def reference(x, p, cos, sin, num_heads):
    b, s, d = x.shape
    hd = d // num_heads
    qkv = x @ p["wqkv"] + p["bqkv"]
    qkv = qkv.reshape(b, s, 3, num_heads, hd)
    q, k, v = qkv[:, :, 0], qkv[:, :, 1], qkv[:, :, 2]

    def ln(t, g, beta):
        mu = t.mean(-1, keepdims=True)
        var = ((t - mu) ** 2).mean(-1, keepdims=True)
        return (t - mu) / jnp.sqrt(var + 1e-6) * g + beta

    q = ln(q, p["qg"], p["qb"])
    k = ln(k, p["kg"], p["kb"])

    def rot_half(t):
        tr = t.reshape(*t.shape[:-1], -1, 2)
        real, imag = tr[..., 0], tr[..., 1]
        return jnp.stack([-imag, real], axis=-1).reshape(t.shape)

    c = cos[None, :, None, :]
    sn = sin[None, :, None, :]
    q = q * c + rot_half(q) * sn
    k = k * c + rot_half(k) * sn

    scale = 1.0 / math.sqrt(hd)
    scores = jnp.einsum("bqhd,bkhd->bhqk", q, k) * scale
    probs = jax.nn.softmax(scores, axis=-1)
    ctx = jnp.einsum("bhqk,bkhd->bqhd", probs, v).reshape(b, s, d)
    return ctx @ p["wo"] + p["bo"]


if __name__ == "__main__":
    b, s, num_heads, head_dim = 2, 16, 4, 8
    d = num_heads * head_dim

    key = jax.random.PRNGKey(0)
    ks = jax.random.split(key, 9)
    x = jax.random.normal(ks[0], (b, s, d), jnp.float32)

    params = {
        "wqkv": 0.1 * jax.random.normal(ks[1], (d, 3 * d), jnp.float32),
        "bqkv": 0.05 * jax.random.normal(ks[2], (3 * d,), jnp.float32),
        "wo": 0.1 * jax.random.normal(ks[3], (d, d), jnp.float32),
        "bo": 0.05 * jax.random.normal(ks[4], (d,), jnp.float32),
        "qg": 1.0 + 0.1 * jax.random.normal(ks[5], (head_dim,), jnp.float32),
        "qb": 0.05 * jax.random.normal(ks[6], (head_dim,), jnp.float32),
        "kg": 1.0 + 0.1 * jax.random.normal(ks[7], (head_dim,), jnp.float32),
        "kb": 0.05 * jax.random.normal(ks[8], (head_dim,), jnp.float32),
    }

    # RoPE tables (cos, sin) of shape (seq, head_dim), interleaved-pair layout.
    pos = jnp.arange(s, dtype=jnp.float32)
    inv_freq = 1.0 / (10000.0 ** (jnp.arange(0, head_dim, 2, dtype=jnp.float32) / head_dim))
    ang = pos[:, None] * inv_freq[None, :]                          # (s, hd/2)
    cos = jnp.repeat(jnp.cos(ang), 2, axis=-1)                      # (s, hd)
    sin = jnp.repeat(jnp.sin(ang), 2, axis=-1)

    out = self_attention_layer(x, params, cos, sin, num_heads=num_heads)
    out = jax.block_until_ready(out)

    ref = jax.block_until_ready(reference(x, params, cos, sin, num_heads))
    assert out.shape == (b, s, d)
    assert bool(jnp.all(jnp.isfinite(out)))
    assert bool(jnp.allclose(out, ref, atol=5e-2, rtol=5e-2)), (
        f"max abs err {float(jnp.max(jnp.abs(out - ref)))}")

    print("KERNEL_OK")
</pallas_src>

<mosaic_0001>
module attributes {stable_mosaic.version = 11 : i64} {
  func.func @_qkv_proj_kernel(%arg0: i32, %arg1: i32, %arg2: i32, %arg3: i32, %arg4: memref<1x16x32xbf16, #tpu.memory_space<vmem>>, %arg5: memref<1x32x32xbf16, #tpu.memory_space<vmem>>, %arg6: memref<1x1x32xf32, #tpu.memory_space<vmem>>, %arg7: memref<1x1x32xf32, #tpu.memory_space<vmem>>, %arg8: memref<1x1x32xf32, #tpu.memory_space<vmem>>, %arg9: memref<16x8xf32, #tpu.memory_space<vmem>>, %arg10: memref<16x8xf32, #tpu.memory_space<vmem>>, %arg11: memref<8x8xbf16, #tpu.memory_space<vmem>>, %arg12: memref<1x4x16x8xbf16, #tpu.memory_space<vmem>>) attributes {dimension_semantics = [#tpu.dimension_semantics<parallel>, #tpu.dimension_semantics<parallel>, #tpu.dimension_semantics<parallel>, #tpu.dimension_semantics<arbitrary>], iteration_bounds = array<i64: 2, 3, 1, 1>, scalar_prefetch = 0 : i64, scratch_operands = 0 : i64, tpu.core_type = #tpu.core_type<tc>, window_params = [{transform_indices = @transform_0, window_bounds = array<i64: 1, 16, 32>}, {transform_indices = @transform_1, window_bounds = array<i64: 1, 32, 32>}, {transform_indices = @transform_2, window_bounds = array<i64: 1, 1, 32>}, {transform_indices = @transform_3, window_bounds = array<i64: 1, 1, 32>}, {transform_indices = @transform_4, window_bounds = array<i64: 1, 1, 32>}, {transform_indices = @transform_5, window_bounds = array<i64: 16, 8>}, {transform_indices = @transform_6, window_bounds = array<i64: 16, 8>}, {pipeline_mode = #tpu.pipeline_mode<synchronous>, transform_indices = @transform_7, window_bounds = array<i64: 8, 8>}, {transform_indices = @transform_8, window_bounds = array<i64: 1, 4, 16, 8>}]} {
    %c0 = arith.constant 0 : index
    %c0_0 = arith.constant 0 : index
    %c0_1 = arith.constant 0 : index
    %0 = vector.load %arg4[%c0, %c0_0, %c0_1] : memref<1x16x32xbf16, #tpu.memory_space<vmem>>, vector<1x16x32xbf16>
    %1 = vector.shape_cast %0 : vector<1x16x32xbf16> to vector<16x32xbf16>
    %c0_2 = arith.constant 0 : index
    %c0_3 = arith.constant 0 : index
    %c0_4 = arith.constant 0 : index
    %2 = vector.load %arg5[%c0_2, %c0_3, %c0_4] : memref<1x32x32xbf16, #tpu.memory_space<vmem>>, vector<1x32x32xbf16>
    %3 = vector.shape_cast %2 : vector<1x32x32xbf16> to vector<32x32xbf16>
    %cst = arith.constant dense<0.000000e+00> : vector<16x32xf32>
    %4 = tpu.matmul %1, %3, %cst {dimension_numbers = #tpu.dot_dimension_numbers<[1], [0], [0], [1], [0, 0, 1, 1], [], []>} : vector<16x32xbf16>, vector<32x32xbf16>, vector<16x32xf32> -> vector<16x32xf32>
    %c0_5 = arith.constant 0 : index
    %c0_6 = arith.constant 0 : index
    %c0_7 = arith.constant 0 : index
    %5 = vector.load %arg6[%c0_5, %c0_6, %c0_7] : memref<1x1x32xf32, #tpu.memory_space<vmem>>, vector<1x1x32xf32>
    %6 = vector.shape_cast %5 : vector<1x1x32xf32> to vector<1x32xf32>
    %7 = vector.broadcast %6 : vector<1x32xf32> to vector<16x32xf32>
    %8 = arith.addf %4, %7 : vector<16x32xf32>
    %c2_i32 = arith.constant 2 : i32
    %9 = arith.cmpi eq, %arg1, %c2_i32 : i32
    %10 = arith.extui %9 : i1 to i32
    %c0_i32 = arith.constant 0 : i32
    %11 = arith.cmpi ne, %10, %c0_i32 : i32
    scf.if %11 {
      %15 = arith.truncf %8 : vector<16x32xf32> to vector<16x32xbf16>
      %16 = vector.extract_strided_slice %15 {offsets = [0, 0], sizes = [16, 8], strides = [1, 1]} : vector<16x32xbf16> to vector<16x8xbf16>
      %c0_10 = arith.constant 0 : index
      %c0_11 = arith.constant 0 : index
      %c0_12 = arith.constant 0 : index
      %c0_13 = arith.constant 0 : index
      %17 = vector.load %arg12[%c0_10, %c0_11, %c0_12, %c0_13] : memref<1x4x16x8xbf16, #tpu.memory_space<vmem>>, vector<1x1x16x8xbf16>
      %18 = vector.shape_cast %17 : vector<1x1x16x8xbf16> to vector<16x8xbf16>
      %19 = vector.shape_cast %16 : vector<16x8xbf16> to vector<1x1x16x8xbf16>
      tpu.vector_store %arg12[%c0_10, %c0_11, %c0_12, %c0_13], %19 {strides = array<i32>} : memref<1x4x16x8xbf16, #tpu.memory_space<vmem>>, vector<1x1x16x8xbf16>,
      %20 = vector.extract_strided_slice %15 {offsets = [0, 8], sizes = [16, 8], strides = [1, 1]} : vector<16x32xbf16> to vector<16x8xbf16>
      %c0_14 = arith.constant 0 : index
      %c1 = arith.constant 1 : index
      %c0_15 = arith.constant 0 : index
      %c0_16 = arith.constant 0 : index
      %21 = vector.load %arg12[%c0_14, %c1, %c0_15, %c0_16] : memref<1x4x16x8xbf16, #tpu.memory_space<vmem>>, vector<1x1x16x8xbf16>
      %22 = vector.shape_cast %21 : vector<1x1x16x8xbf16> to vector<16x8xbf16>
      %23 = vector.shape_cast %20 : vector<16x8xbf16> to vector<1x1x16x8xbf16>
      tpu.vector_store %arg12[%c0_14, %c1, %c0_15, %c0_16], %23 {strides = array<i32>} : memref<1x4x16x8xbf16, #tpu.memory_space<vmem>>, vector<1x1x16x8xbf16>,
      %24 = vector.extract_strided_slice %15 {offsets = [0, 16], sizes = [16, 8], strides = [1, 1]} : vector<16x32xbf16> to vector<16x8xbf16>
      %c0_17 = arith.constant 0 : index
      %c2 = arith.constant 2 : index
      %c0_18 = arith.constant 0 : index
      %c0_19 = arith.constant 0 : index
      %25 = vector.load %arg12[%c0_17, %c2, %c0_18, %c0_19] : memref<1x4x16x8xbf16, #tpu.memory_space<vmem>>, vector<1x1x16x8xbf16>
      %26 = vector.shape_cast %25 : vector<1x1x16x8xbf16> to vector<16x8xbf16>
      %27 = vector.shape_cast %24 : vector<16x8xbf16> to vector<1x1x16x8xbf16>
      tpu.vector_store %arg12[%c0_17, %c2, %c0_18, %c0_19], %27 {strides = array<i32>} : memref<1x4x16x8xbf16, #tpu.memory_space<vmem>>, vector<1x1x16x8xbf16>,
      %28 = vector.extract_strided_slice %15 {offsets = [0, 24], sizes = [16, 8], strides = [1, 1]} : vector<16x32xbf16> to vector<16x8xbf16>
      %c0_20 = arith.constant 0 : index
      %c3 = arith.constant 3 : index
      %c0_21 = arith.constant 0 : index
      %c0_22 = arith.constant 0 : index
      %29 = vector.load %arg12[%c0_20, %c3, %c0_21, %c0_22] : memref<1x4x16x8xbf16, #tpu.memory_space<vmem>>, vector<1x1x16x8xbf16>
      %30 = vector.shape_cast %29 : vector<1x1x16x8xbf16> to vector<16x8xbf16>
      %31 = vector.shape_cast %28 : vector<16x8xbf16> to vector<1x1x16x8xbf16>
      tpu.vector_store %arg12[%c0_20, %c3, %c0_21, %c0_22], %31 {strides = array<i32>} : memref<1x4x16x8xbf16, #tpu.memory_space<vmem>>, vector<1x1x16x8xbf16>,
    } else {
    }
    %c2_i32_8 = arith.constant 2 : i32
    %12 = arith.cmpi slt, %arg1, %c2_i32_8 : i32
    %13 = arith.extui %12 : i1 to i32
    %c0_i32_9 = arith.constant 0 : i32
    %14 = arith.cmpi ne, %13, %c0_i32_9 : i32
    scf.if %14 {
      %c0_10 = arith.constant 0 : index
      %c0_11 = arith.constant 0 : index
      %c0_12 = arith.constant 0 : index
      %15 = vector.load %arg7[%c0_10, %c0_11, %c0_12] : memref<1x1x32xf32, #tpu.memory_space<vmem>>, vector<1x1x32xf32>
      %16 = vector.shape_cast %15 : vector<1x1x32xf32> to vector<1x32xf32>
      %c0_13 = arith.constant 0 : index
      %c0_14 = arith.constant 0 : index
      %c0_15 = arith.constant 0 : index
      %17 = vector.load %arg8[%c0_13, %c0_14, %c0_15] : memref<1x1x32xf32, #tpu.memory_space<vmem>>, vector<1x1x32xf32>
      %18 = vector.shape_cast %17 : vector<1x1x32xf32> to vector<1x32xf32>
      %c0_16 = arith.constant 0 : index
      %c0_17 = arith.constant 0 : index
      %19 = vector.load %arg9[%c0_16, %c0_17] : memref<16x8xf32, #tpu.memory_space<vmem>>, vector<16x8xf32>
      %c0_18 = arith.constant 0 : index
      %c0_19 = arith.constant 0 : index
      %20 = vector.load %arg10[%c0_18, %c0_19] : memref<16x8xf32, #tpu.memory_space<vmem>>, vector<16x8xf32>
      %c0_20 = arith.constant 0 : index
      %c0_21 = arith.constant 0 : index
      %21 = vector.load %arg11[%c0_20, %c0_21] : memref<8x8xbf16, #tpu.memory_space<vmem>>, vector<8x8xbf16>
      %22 = vector.extract_strided_slice %8 {offsets = [0, 0], sizes = [16, 8], strides = [1, 1]} : vector<16x32xf32> to vector<16x8xf32>
      %cst_22 = arith.constant dense<0.000000e+00> : vector<16xf32>
      %23 = vector.multi_reduction <add>, %22, %cst_22 [1] : vector<16x8xf32> to vector<16xf32>
      %24 = vector.shape_cast %23 : vector<16xf32> to vector<16x1xf32>
      %cst_23 = arith.constant 8.000000e+00 : f32
      %25 = vector.broadcast %cst_23 : f32 to vector<16x1xf32>
      %26 = arith.divf %24, %25 : vector<16x1xf32>
      %27 = vector.broadcast %26 : vector<16x1xf32> to vector<16x8xf32>
      %28 = arith.subf %22, %27 : vector<16x8xf32>
      %29 = arith.mulf %28, %28 : vector<16x8xf32>
      %cst_24 = arith.constant dense<0.000000e+00> : vector<16xf32>
      %30 = vector.multi_reduction <add>, %29, %cst_24 [1] : vector<16x8xf32> to vector<16xf32>
      %31 = vector.shape_cast %30 : vector<16xf32> to vector<16x1xf32>
      %cst_25 = arith.constant 8.000000e+00 : f32
      %32 = vector.broadcast %cst_25 : f32 to vector<16x1xf32>
      %33 = arith.divf %31, %32 : vector<16x1xf32>
      %cst_26 = arith.constant 9.99999997E-7 : f32
      %34 = vector.broadcast %cst_26 : f32 to vector<16x1xf32>
      %35 = arith.addf %33, %34 : vector<16x1xf32>
      %36 = math.rsqrt %35 : vector<16x1xf32>
      %37 = vector.broadcast %36 : vector<16x1xf32> to vector<16x8xf32>
      %38 = arith.mulf %28, %37 : vector<16x8xf32>
      %39 = vector.extract_strided_slice %16 {offsets = [0, 0], sizes = [1, 8], strides = [1, 1]} : vector<1x32xf32> to vector<1x8xf32>
      %40 = vector.broadcast %39 : vector<1x8xf32> to vector<16x8xf32>
      %41 = arith.mulf %38, %40 : vector<16x8xf32>
      %42 = vector.extract_strided_slice %18 {offsets = [0, 0], sizes = [1, 8], strides = [1, 1]} : vector<1x32xf32> to vector<1x8xf32>
      %43 = vector.broadcast %42 : vector<1x8xf32> to vector<16x8xf32>
      %44 = arith.addf %41, %43 : vector<16x8xf32>
      %45 = arith.truncf %44 : vector<16x8xf32> to vector<16x8xbf16>
      %cst_27 = arith.constant dense<0.000000e+00> : vector<16x8xf32>
      %46 = tpu.matmul %45, %21, %cst_27 {dimension_numbers = #tpu.dot_dimension_numbers<[1], [0], [0], [1], [0, 0, 1, 1], [], []>} : vector<16x8xbf16>, vector<8x8xbf16>, vector<16x8xf32> -> vector<16x8xf32>
      %47 = arith.mulf %44, %19 : vector<16x8xf32>
      %48 = arith.mulf %46, %20 : vector<16x8xf32>
      %49 = arith.addf %47, %48 : vector<16x8xf32>
      %50 = arith.truncf %49 : vector<16x8xf32> to vector<16x8xbf16>
      %c0_28 = arith.constant 0 : index
      %c0_29 = arith.constant 0 : index
      %c0_30 = arith.constant 0 : index
      %c0_31 = arith.constant 0 : index
      %51 = vector.load %arg12[%c0_28, %c0_29, %c0_30, %c0_31] : memref<1x4x16x8xbf16, #tpu.memory_space<vmem>>, vector<1x1x16x8xbf16>
      %52 = vector.shape_cast %51 : vector<1x1x16x8xbf16> to vector<16x8xbf16>
      %53 = vector.shape_cast %50 : vector<16x8xbf16> to vector<1x1x16x8xbf16>
      tpu.vector_store %arg12[%c0_28, %c0_29, %c0_30, %c0_31], %53 {strides = array<i32>} : memref<1x4x16x8xbf16, #tpu.memory_space<vmem>>, vector<1x1x16x8xbf16>,
      %54 = vector.extract_strided_slice %8 {offsets = [0, 8], sizes = [16, 8], strides = [1, 1]} : vector<16x32xf32> to vector<16x8xf32>
      %cst_32 = arith.constant dense<0.000000e+00> : vector<16xf32>
      %55 = vector.multi_reduction <add>, %54, %cst_32 [1] : vector<16x8xf32> to vector<16xf32>
      %56 = vector.shape_cast %55 : vector<16xf32> to vector<16x1xf32>
      %cst_33 = arith.constant 8.000000e+00 : f32
      %57 = vector.broadcast %cst_33 : f32 to vector<16x1xf32>
      %58 = arith.divf %56, %57 : vector<16x1xf32>
      %59 = vector.broadcast %58 : vector<16x1xf32> to vector<16x8xf32>
      %60 = arith.subf %54, %59 : vector<16x8xf32>
      %61 = arith.mulf %60, %60 : vector<16x8xf32>
      %cst_34 = arith.constant dense<0.000000e+00> : vector<16xf32>
      %62 = vector.multi_reduction <add>, %61, %cst_34 [1] : vector<16x8xf32> to vector<16xf32>
      %63 = vector.shape_cast %62 : vector<16xf32> to vector<16x1xf32>
      %cst_35 = arith.constant 8.000000e+00 : f32
      %64 = vector.broadcast %cst_35 : f32 to vector<16x1xf32>
      %65 = arith.divf %63, %64 : vector<16x1xf32>
      %cst_36 = arith.constant 9.99999997E-7 : f32
      %66 = vector.broadcast %cst_36 : f32 to vector<16x1xf32>
      %67 = arith.addf %65, %66 : vector<16x1xf32>
      %68 = math.rsqrt %67 : vector<16x1xf32>
      %69 = vector.broadcast %68 : vector<16x1xf32> to vector<16x8xf32>
      %70 = arith.mulf %60, %69 : vector<16x8xf32>
      %71 = vector.extract_strided_slice %16 {offsets = [0, 8], sizes = [1, 8], strides = [1, 1]} : vector<1x32xf32> to vector<1x8xf32>
      %72 = vector.broadcast %71 : vector<1x8xf32> to vector<16x8xf32>
      %73 = arith.mulf %70, %72 : vector<16x8xf32>
      %74 = vector.extract_strided_slice %18 {offsets = [0, 8], sizes = [1, 8], strides = [1, 1]} : vector<1x32xf32> to vector<1x8xf32>
      %75 = vector.broadcast %74 : vector<1x8xf32> to vector<16x8xf32>
      %76 = arith.addf %73, %75 : vector<16x8xf32>
      %77 = arith.truncf %76 : vector<16x8xf32> to vector<16x8xbf16>
      %cst_37 = arith.constant dense<0.000000e+00> : vector<16x8xf32>
      %78 = tpu.matmul %77, %21, %cst_37 {dimension_numbers = #tpu.dot_dimension_numbers<[1], [0], [0], [1], [0, 0, 1, 1], [], []>} : vector<16x8xbf16>, vector<8x8xbf16>, vector<16x8xf32> -> vector<16x8xf32>
      %79 = arith.mulf %76, %19 : vector<16x8xf32>
      %80 = arith.mulf %78, %20 : vector<16x8xf32>
      %81 = arith.addf %79, %80 : vector<16x8xf32>
      %82 = arith.truncf %81 : vector<16x8xf32> to vector<16x8xbf16>
      %c0_38 = arith.constant 0 : index
      %c1 = arith.constant 1 : index
      %c0_39 = arith.constant 0 : index
      %c0_40 = arith.constant 0 : index
      %83 = vector.load %arg12[%c0_38, %c1, %c0_39, %c0_40] : memref<1x4x16x8xbf16, #tpu.memory_space<vmem>>, vector<1x1x16x8xbf16>
      %84 = vector.shape_cast %83 : vector<1x1x16x8xbf16> to vector<16x8xbf16>
      %85 = vector.shape_cast %82 : vector<16x8xbf16> to vector<1x1x16x8xbf16>
      tpu.vector_store %arg12[%c0_38, %c1, %c0_39, %c0_40], %85 {strides = array<i32>} : memref<1x4x16x8xbf16, #tpu.memory_space<vmem>>, vector<1x1x16x8xbf16>,
      %86 = vector.extract_strided_slice %8 {offsets = [0, 16], sizes = [16, 8], strides = [1, 1]} : vector<16x32xf32> to vector<16x8xf32>
      %cst_41 = arith.constant dense<0.000000e+00> : vector<16xf32>
      %87 = vector.multi_reduction <add>, %86, %cst_41 [1] : vector<16x8xf32> to vector<16xf32>
      %88 = vector.shape_cast %87 : vector<16xf32> to vector<16x1xf32>
      %cst_42 = arith.constant 8.000000e+00 : f32
      %89 = vector.broadcast %cst_42 : f32 to vector<16x1xf32>
      %90 = arith.divf %88, %89 : vector<16x1xf32>
      %91 = vector.broadcast %90 : vector<16x1xf32> to vector<16x8xf32>
      %92 = arith.subf %86, %91 : vector<16x8xf32>
      %93 = arith.mulf %92, %92 : vector<16x8xf32>
      %cst_43 = arith.constant dense<0.000000e+00> : vector<16xf32>
      %94 = vector.multi_reduction <add>, %93, %cst_43 [1] : vector<16x8xf32> to vector<16xf32>
      %95 = vector.shape_cast %94 : vector<16xf32> to vector<16x1xf32>
      %cst_44 = arith.constant 8.000000e+00 : f32
      %96 = vector.broadcast %cst_44 : f32 to vector<16x1xf32>
      %97 = arith.divf %95, %96 : vector<16x1xf32>
      %cst_45 = arith.constant 9.99999997E-7 : f32
      %98 = vector.broadcast %cst_45 : f32 to vector<16x1xf32>
      %99 = arith.addf %97, %98 : vector<16x1xf32>
      %100 = math.rsqrt %99 : vector<16x1xf32>
      %101 = vector.broadcast %100 : vector<16x1xf32> to vector<16x8xf32>
      %102 = arith.mulf %92, %101 : vector<16x8xf32>
      %103 = vector.extract_strided_slice %16 {offsets = [0, 16], sizes = [1, 8], strides = [1, 1]} : vector<1x32xf32> to vector<1x8xf32>
      %104 = vector.broadcast %103 : vector<1x8xf32> to vector<16x8xf32>
      %105 = arith.mulf %102, %104 : vector<16x8xf32>
      %106 = vector.extract_strided_slice %18 {offsets = [0, 16], sizes = [1, 8], strides = [1, 1]} : vector<1x32xf32> to vector<1x8xf32>
      %107 = vector.broadcast %106 : vector<1x8xf32> to vector<16x8xf32>
      %108 = arith.addf %105, %107 : vector<16x8xf32>
      %109 = arith.truncf %108 : vector<16x8xf32> to vector<16x8xbf16>
      %cst_46 = arith.constant dense<0.000000e+00> : vector<16x8xf32>
      %110 = tpu.matmul %109, %21, %cst_46 {dimension_numbers = #tpu.dot_dimension_numbers<[1], [0], [0], [1], [0, 0, 1, 1], [], []>} : vector<16x8xbf16>, vector<8x8xbf16>, vector<16x8xf32> -> vector<16x8xf32>
      %111 = arith.mulf %108, %19 : vector<16x8xf32>
      %112 = arith.mulf %110, %20 : vector<16x8xf32>
      %113 = arith.addf %111, %112 : vector<16x8xf32>
      %114 = arith.truncf %113 : vector<16x8xf32> to vector<16x8xbf16>
      %c0_47 = arith.constant 0 : index
      %c2 = arith.constant 2 : index
      %c0_48 = arith.constant 0 : index
      %c0_49 = arith.constant 0 : index
      %115 = vector.load %arg12[%c0_47, %c2, %c0_48, %c0_49] : memref<1x4x16x8xbf16, #tpu.memory_space<vmem>>, vector<1x1x16x8xbf16>
      %116 = vector.shape_cast %115 : vector<1x1x16x8xbf16> to vector<16x8xbf16>
      %117 = vector.shape_cast %114 : vector<16x8xbf16> to vector<1x1x16x8xbf16>
      tpu.vector_store %arg12[%c0_47, %c2, %c0_48, %c0_49], %117 {strides = array<i32>} : memref<1x4x16x8xbf16, #tpu.memory_space<vmem>>, vector<1x1x16x8xbf16>,
      %118 = vector.extract_strided_slice %8 {offsets = [0, 24], sizes = [16, 8], strides = [1, 1]} : vector<16x32xf32> to vector<16x8xf32>
      %cst_50 = arith.constant dense<0.000000e+00> : vector<16xf32>
      %119 = vector.multi_reduction <add>, %118, %cst_50 [1] : vector<16x8xf32> to vector<16xf32>
      %120 = vector.shape_cast %119 : vector<16xf32> to vector<16x1xf32>
      %cst_51 = arith.constant 8.000000e+00 : f32
      %121 = vector.broadcast %cst_51 : f32 to vector<16x1xf32>
      %122 = arith.divf %120, %121 : vector<16x1xf32>
      %123 = vector.broadcast %122 : vector<16x1xf32> to vector<16x8xf32>
      %124 = arith.subf %118, %123 : vector<16x8xf32>
      %125 = arith.mulf %124, %124 : vector<16x8xf32>
      %cst_52 = arith.constant dense<0.000000e+00> : vector<16xf32>
      %126 = vector.multi_reduction <add>, %125, %cst_52 [1] : vector<16x8xf32> to vector<16xf32>
      %127 = vector.shape_cast %126 : vector<16xf32> to vector<16x1xf32>
      %cst_53 = arith.constant 8.000000e+00 : f32
      %128 = vector.broadcast %cst_53 : f32 to vector<16x1xf32>
      %129 = arith.divf %127, %128 : vector<16x1xf32>
      %cst_54 = arith.constant 9.99999997E-7 : f32
      %130 = vector.broadcast %cst_54 : f32 to vector<16x1xf32>
      %131 = arith.addf %129, %130 : vector<16x1xf32>
      %132 = math.rsqrt %131 : vector<16x1xf32>
      %133 = vector.broadcast %132 : vector<16x1xf32> to vector<16x8xf32>
      %134 = arith.mulf %124, %133 : vector<16x8xf32>
      %135 = vector.extract_strided_slice %16 {offsets = [0, 24], sizes = [1, 8], strides = [1, 1]} : vector<1x32xf32> to vector<1x8xf32>
      %136 = vector.broadcast %135 : vector<1x8xf32> to vector<16x8xf32>
      %137 = arith.mulf %134, %136 : vector<16x8xf32>
      %138 = vector.extract_strided_slice %18 {offsets = [0, 24], sizes = [1, 8], strides = [1, 1]} : vector<1x32xf32> to vector<1x8xf32>
      %139 = vector.broadcast %138 : vector<1x8xf32> to vector<16x8xf32>
      %140 = arith.addf %137, %139 : vector<16x8xf32>
      %141 = arith.truncf %140 : vector<16x8xf32> to vector<16x8xbf16>
      %cst_55 = arith.constant dense<0.000000e+00> : vector<16x8xf32>
      %142 = tpu.matmul %141, %21, %cst_55 {dimension_numbers = #tpu.dot_dimension_numbers<[1], [0], [0], [1], [0, 0, 1, 1], [], []>} : vector<16x8xbf16>, vector<8x8xbf16>, vector<16x8xf32> -> vector<16x8xf32>
      %143 = arith.mulf %140, %19 : vector<16x8xf32>
      %144 = arith.mulf %142, %20 : vector<16x8xf32>
      %145 = arith.addf %143, %144 : vector<16x8xf32>
      %146 = arith.truncf %145 : vector<16x8xf32> to vector<16x8xbf16>
      %c0_56 = arith.constant 0 : index
      %c3 = arith.constant 3 : index
      %c0_57 = arith.constant 0 : index
      %c0_58 = arith.constant 0 : index
      %147 = vector.load %arg12[%c0_56, %c3, %c0_57, %c0_58] : memref<1x4x16x8xbf16, #tpu.memory_space<vmem>>, vector<1x1x16x8xbf16>
      %148 = vector.shape_cast %147 : vector<1x1x16x8xbf16> to vector<16x8xbf16>
      %149 = vector.shape_cast %146 : vector<16x8xbf16> to vector<1x1x16x8xbf16>
      tpu.vector_store %arg12[%c0_56, %c3, %c0_57, %c0_58], %149 {strides = array<i32>} : memref<1x4x16x8xbf16, #tpu.memory_space<vmem>>, vector<1x1x16x8xbf16>,
    } else {
    }
    return
  }
  func.func @transform_0(%arg0: i32, %arg1: i32, %arg2: i32, %arg3: i32) -> (i32, i32, i32) {
    %c0_i32 = arith.constant 0 : i32
    %c0_i32_0 = arith.constant 0 : i32
    return %arg0, %arg3, %c0_i32 : i32, i32, i32
  }
  func.func @transform_1(%arg0: i32, %arg1: i32, %arg2: i32, %arg3: i32) -> (i32, i32, i32) {
    %c0_i32 = arith.constant 0 : i32
    %c0_i32_0 = arith.constant 0 : i32
    return %arg1, %c0_i32, %arg2 : i32, i32, i32
  }
  func.func @transform_2(%arg0: i32, %arg1: i32, %arg2: i32, %arg3: i32) -> (i32, i32, i32) {
    %c0_i32 = arith.constant 0 : i32
    %c0_i32_0 = arith.constant 0 : i32
    return %arg1, %c0_i32, %arg2 : i32, i32, i32
  }
  func.func @transform_3(%arg0: i32, %arg1: i32, %arg2: i32, %arg3: i32) -> (i32, i32, i32) {
    %c0_i32 = arith.constant 0 : i32
    %c0_i32_0 = arith.constant 0 : i32
    return %arg1, %c0_i32, %arg2 : i32, i32, i32
  }
  func.func @transform_4(%arg0: i32, %arg1: i32, %arg2: i32, %arg3: i32) -> (i32, i32, i32) {
    %c0_i32 = arith.constant 0 : i32
    %c0_i32_0 = arith.constant 0 : i32
    return %arg1, %c0_i32, %arg2 : i32, i32, i32
  }
  func.func @transform_5(%arg0: i32, %arg1: i32, %arg2: i32, %arg3: i32) -> (i32, i32) {
    %c0_i32 = arith.constant 0 : i32
    %c0_i32_0 = arith.constant 0 : i32
    return %arg3, %c0_i32 : i32, i32
  }
  func.func @transform_6(%arg0: i32, %arg1: i32, %arg2: i32, %arg3: i32) -> (i32, i32) {
    %c0_i32 = arith.constant 0 : i32
    %c0_i32_0 = arith.constant 0 : i32
    return %arg3, %c0_i32 : i32, i32
  }
  func.func @transform_7(%arg0: i32, %arg1: i32, %arg2: i32, %arg3: i32) -> (i32, i32) {
    %c0_i32 = arith.constant 0 : i32
    %c0_i32_0 = arith.constant 0 : i32
    %c0_i32_1 = arith.constant 0 : i32
    return %c0_i32, %c0_i32_0 : i32, i32
  }
  func.func @transform_8(%arg0: i32, %arg1: i32, %arg2: i32, %arg3: i32) -> (i32, i32, i32, i32) {
    %c1_i32 = arith.constant 1 : i32
    %0 = arith.muli %arg1, %c1_i32 : i32
    %1 = arith.addi %0, %arg2 : i32
    %c0_i32 = arith.constant 0 : i32
    %c0_i32_0 = arith.constant 0 : i32
    return %arg0, %1, %arg3, %c0_i32 : i32, i32, i32, i32
  }
}

</mosaic_0001>

<llo_original>
// kernel: tpu_custom_call.1
$region0: #{tpu_custom_call.1}
  #allocation0 [shape = 'u32[]', space=smem, size = 0x4, offset = 0x4, fixed_abs, tag = 'smem constant byte address 0x4 - core index']
  #allocation1 [shape = 'u32[144,128]{1,0:T(1,128)}', space=vmem, size = 0x12000, scoped, tag = 'internal scratch']
  %s0 = inlined_call_operand.hbm [shape: bf16[2,16,32], index: 0, kind: input, shape index: {}]
  %s1 = inlined_call_operand.vmem [shape: bf16[3,32,32], index: 1, kind: input, shape index: {}]
  %s2 = inlined_call_operand.hbm [shape: f32[3,1,32], index: 2, kind: input, shape index: {}]
  %s3 = inlined_call_operand.hbm [shape: f32[3,1,32], index: 3, kind: input, shape index: {}]
  %s4 = inlined_call_operand.hbm [shape: f32[3,1,32], index: 4, kind: input, shape index: {}]
  %s5 = inlined_call_operand.vmem [shape: f32[16,8], index: 5, kind: input, shape index: {}]
  %s6 = inlined_call_operand.vmem [shape: f32[16,8], index: 6, kind: input, shape index: {}]
  %s7 = inlined_call_operand.vmem [shape: bf16[8,8], index: 7, kind: input, shape index: {}]
  %s8 = inlined_call_operand.vmem [shape: bf16[2,12,16,8], index: 8, kind: output, shape index: {}]
  %s9 = sld [smem:[#allocation0]]
  $region89: #{tpu_custom_call.1} parent=0
    _
  %s11 = ssub.s32 1, %s9
  %s12 = scalar_select 0, %s11, %s9
  $region1: #{tpu_custom_call.1} parent=0
    #allocation2 [shape = 'u8[8192]{0}', space=vmem, size = 0x2000, scoped, tag = 'input window, operand 0']
    #allocation3 [shape = 's32[2]{0}', space=sflag, size = 0x8, scoped, tag = 'scoped memory for tpu_custom_call.1']
    #allocation4 [shape = 'u8[1024]{0}', space=vmem, size = 0x400, scoped, tag = 'input window, operand 2']
    #allocation5 [shape = 's32[2]{0}', space=sflag, size = 0x8, scoped, tag = 'scoped memory for tpu_custom_call.1']
    #allocation6 [shape = 'u8[1024]{0}', space=vmem, size = 0x400, scoped, tag = 'input window, operand 3']
    #allocation7 [shape = 'u8[1024]{0}', space=vmem, size = 0x400, scoped, tag = 'input window, operand 4']
    #allocation8 [shape = 's32[2]{0}', space=sflag, size = 0x8, scoped, tag = 'scoped memory for tpu_custom_call.1']
    %13 = vsyncpa [#allocation3], 0
    %s14 = scalar_lea.sflag [#allocation3], 1
    %15 = vsyncpa %s14, 0
    %16 = vsyncpa [#allocation5], 0
    %s17 = scalar_lea.sflag [#allocation5], 1
    %18 = vsyncpa %s17, 0
    %19 = vsyncpa [#allocation8], 0
    %s20 = scalar_lea.sflag [#allocation8], 1
    %21 = vsyncpa %s20, 0
    loop: start=0, step=1, limit=8
    $region2: #{tpu_custom_call.1} parent=1 // loop_pre_header
      _
    $region3: #{tpu_custom_call.1} parent=1 // loop_header
      %s23 = sphi 0, %s27
      %p24 = scmp.ge.s32.totalorder %s23, 8
      %s30 = sphi 0, %s56
      %s31 = sphi 0, %s52
      %s32 = sphi 0, %s48
      %s33 = sphi 0, %s44
      %s34 = sphi 0, %s30
      %s35 = sphi 0, %s31
      %s36 = sphi 0, %s32
      %s37 = sphi 0, %s33
      %s38 = sphi 0, %s34
      %s39 = sphi 0, %s35
      %s40 = sphi 0, %s36
      %s41 = sphi 0, %s37
      %s61 = sphi 0, %s63
      %s64 = sphi 0, %s61
      %s65 = sphi 0, %s64
      %s81 = sphi 0, %s65
      %s89 = sphi 0, %s91
      %s92 = sphi 0, %s89
      %s93 = sphi 0, %s92
      %s109 = sphi 0, %s93
      %s117 = sphi 0, %s119
      %s120 = sphi 0, %s117
      %s121 = sphi 0, %s120
      %s137 = sphi 0, %s121
      %s145 = sphi 0, %s147
      %s148 = sphi 0, %s145
      %s149 = sphi 0, %s148
      %s165 = sphi 0, %s149
      %s173 = sphi 0, %s175
      %s176 = sphi 0, %s173
      %s177 = sphi 0, %s176
      %s193 = sphi 0, %s177
      %s199 = sphi 0, %s201
      %s202 = sphi 0, %s199
      %s203 = sphi 0, %s202
      %s219 = sphi 0, %s203
      %s225 = sphi 0, %s227
      %s228 = sphi 0, %s225
      %s229 = sphi 0, %s228
      %s245 = sphi 0, %s229
      %s249 = sphi 0, %s249
      %s251 = sphi 0, %s249
      %s252 = sphi 0, %s251
      %s266 = sphi 0, %s252
      %s278 = sphi 0, %s280
      %s281 = sphi 0, %s278
      %s282 = sphi 0, %s281
      %s298 = sphi 0, %s282
    $region4: #{tpu_custom_call.1} parent=1 // loop_header_branch
      %26 = sbr.rel (%p24) target = $region8
    $region5: #{tpu_custom_call.1} parent=1 // loop_body
      %s28 = ssub.s32 %s23, 1
      %s29 = ssub.s32 %s23, 2
      %s42 = sadd.s32 1, %s33
      %p43 = scmp.ge.s32.totalorder %s42, 1
      %s44 = scalar_select %p43, 0, %s42
      %s45 = sadd.s32 1, %s32
      %s46 = scalar_select %p43, %s45, %s32
      %p47 = scmp.ge.s32.totalorder %s46, 1
      %s48 = scalar_select %p47, 0, %s46
      %s49 = sadd.s32 1, %s31
      %s50 = scalar_select %p47, %s49, %s31
      %p51 = scmp.ge.s32.totalorder %s50, 3
      %s52 = scalar_select %p51, 0, %s50
      %s53 = sadd.s32 1, %s30
      %s54 = scalar_select %p51, %s53, %s30
      %p55 = scmp.ge.s32.totalorder %s54, 2
      %s56 = scalar_select %p55, 0, %s54
      %s57 = ssub.s32 %s30, %s56
      %s58 = ssub.s32 %s33, %s44
      %s59 = sor.u32 %s57, %s58
      %p60 = scmp.eq.s32.totalorder %s59, 0
      %s62 = sadd.s32 %s61, 1
      %s63 = scalar_select %p60, %s61, %s62
      %p66 = pneg %p60
      %p67 = scmp.eq.s32.totalorder %s23, 5
      %p68 = por %p66, %p67
      %p69 = scmp.ne.s32.totalorder %s61, %s64
      %p70 = scmp.eq.s32.totalorder %s23, 0
      %p71 = por %p69, %p70
      %p72 = scmp.ne.s32.totalorder %s61, %s64
      %p73 = scmp.eq.s32.totalorder %s28, 5
      %p74 = por %p72, %p73
      %p75 = scmp.ne.s32.totalorder %s64, %s65
      %p76 = scmp.eq.s32.totalorder %s28, 0
      %p77 = por %p75, %p76
      %p78 = scmp.ne.s32.totalorder %s64, %s65
      %p79 = scmp.eq.s32.totalorder %s29, 5
      %p80 = por %p78, %p79
      %p82 = scmp.ne.s32.totalorder %s65, %s81
      %p83 = scmp.eq.s32.totalorder %s29, 0
      %p84 = por %p82, %p83
      %s85 = ssub.s32 %s31, %s52
      %s86 = ssub.s32 %s32, %s48
      %s87 = sor.u32 %s85, %s86
      %p88 = scmp.eq.s32.totalorder %s87, 0
      %s90 = sadd.s32 %s89, 1
      %s91 = scalar_select %p88, %s89, %s90
      %p94 = pneg %p88
      %p95 = scmp.eq.s32.totalorder %s23, 5
      %p96 = por %p94, %p95
      %p97 = scmp.ne.s32.totalorder %s89, %s92
      %p98 = scmp.eq.s32.totalorder %s23, 0
      %p99 = por %p97, %p98
      %p100 = scmp.ne.s32.totalorder %s89, %s92
      %p101 = scmp.eq.s32.totalorder %s28, 5
      %p102 = por %p100, %p101
      %p103 = scmp.ne.s32.totalorder %s92, %s93
      %p104 = scmp.eq.s32.totalorder %s28, 0
      %p105 = por %p103, %p104
      %p106 = scmp.ne.s32.totalorder %s92, %s93
      %p107 = scmp.eq.s32.totalorder %s29, 5
      %p108 = por %p106, %p107
      %p110 = scmp.ne.s32.totalorder %s93, %s109
      %p111 = scmp.eq.s32.totalorder %s29, 0
      %p112 = por %p110, %p111
      %s113 = ssub.s32 %s31, %s52
      %s114 = ssub.s32 %s32, %s48
      %s115 = sor.u32 %s113, %s114
      %p116 = scmp.eq.s32.totalorder %s115, 0
      %s118 = sadd.s32 %s117, 1
      %s119 = scalar_select %p116, %s117, %s118
      %p122 = pneg %p116
      %p123 = scmp.eq.s32.totalorder %s23, 5
      %p124 = por %p122, %p123
      %p125 = scmp.ne.s32.totalorder %s117, %s120
      %p126 = scmp.eq.s32.totalorder %s23, 0
      %p127 = por %p125, %p126
      %p128 = scmp.ne.s32.totalorder %s117, %s120
      %p129 = scmp.eq.s32.totalorder %s28, 5
      %p130 = por %p128, %p129
      %p131 = scmp.ne.s32.totalorder %s120, %s121
      %p132 = scmp.eq.s32.totalorder %s28, 0
      %p133 = por %p131, %p132
      %p134 = scmp.ne.s32.totalorder %s120, %s121
      %p135 = scmp.eq.s32.totalorder %s29, 5
      %p136 = por %p134, %p135
      %p138 = scmp.ne.s32.totalorder %s121, %s137
      %p139 = scmp.eq.s32.totalorder %s29, 0
      %p140 = por %p138, %p139
      %s141 = ssub.s32 %s31, %s52
      %s142 = ssub.s32 %s32, %s48
      %s143 = sor.u32 %s141, %s142
      %p144 = scmp.eq.s32.totalorder %s143, 0
      %s146 = sadd.s32 %s145, 1
      %s147 = scalar_select %p144, %s145, %s146
      %p150 = pneg %p144
      %p151 = scmp.eq.s32.totalorder %s23, 5
      %p152 = por %p150, %p151
      %p153 = scmp.ne.s32.totalorder %s145, %s148
      %p154 = scmp.eq.s32.totalorder %s23, 0
      %p155 = por %p153, %p154
      %p156 = scmp.ne.s32.totalorder %s145, %s148
      %p157 = scmp.eq.s32.totalorder %s28, 5
      %p158 = por %p156, %p157
      %p159 = scmp.ne.s32.totalorder %s148, %s149
      %p160 = scmp.eq.s32.totalorder %s28, 0
      %p161 = por %p159, %p160
      %p162 = scmp.ne.s32.totalorder %s148, %s149
      %p163 = scmp.eq.s32.totalorder %s29, 5
      %p164 = por %p162, %p163
      %p166 = scmp.ne.s32.totalorder %s149, %s165
      %p167 = scmp.eq.s32.totalorder %s29, 0
      %p168 = por %p166, %p167
      %s169 = ssub.s32 %s31, %s52
      %s170 = ssub.s32 %s32, %s48
      %s171 = sor.u32 %s169, %s170
      %p172 = scmp.eq.s32.totalorder %s171, 0
      %s174 = sadd.s32 %s173, 1
      %s175 = scalar_select %p172, %s173, %s174
      %p178 = pneg %p172
      %p179 = scmp.eq.s32.totalorder %s23, 5
      %p180 = por %p178, %p179
      %p181 = scmp.ne.s32.totalorder %s173, %s176
      %p182 = scmp.eq.s32.totalorder %s23, 0
      %p183 = por %p181, %p182
      %p184 = scmp.ne.s32.totalorder %s173, %s176
      %p185 = scmp.eq.s32.totalorder %s28, 5
      %p186 = por %p184, %p185
      %p187 = scmp.ne.s32.totalorder %s176, %s177
      %p188 = scmp.eq.s32.totalorder %s28, 0
      %p189 = por %p187, %p188
      %p190 = scmp.ne.s32.totalorder %s176, %s177
      %p191 = scmp.eq.s32.totalorder %s29, 5
      %p192 = por %p190, %p191
      %p194 = scmp.ne.s32.totalorder %s177, %s193
      %p195 = scmp.eq.s32.totalorder %s29, 0
      %p196 = por %p194, %p195
      %s197 = ssub.s32 %s33, %s44
      %p198 = scmp.eq.s32.totalorder %s197, 0
      %s200 = sadd.s32 %s199, 1
      %s201 = scalar_select %p198, %s199, %s200
      %p204 = pneg %p198
      %p205 = scmp.eq.s32.totalorder %s23, 5
      %p206 = por %p204, %p205
      %p207 = scmp.ne.s32.totalorder %s199, %s202
      %p208 = scmp.eq.s32.totalorder %s23, 0
      %p209 = por %p207, %p208
      %p210 = scmp.ne.s32.totalorder %s199, %s202
      %p211 = scmp.eq.s32.totalorder %s28, 5
      %p212 = por %p210, %p211
      %p213 = scmp.ne.s32.totalorder %s202, %s203
      %p214 = scmp.eq.s32.totalorder %s28, 0
      %p215 = por %p213, %p214
      %p216 = scmp.ne.s32.totalorder %s202, %s203
      %p217 = scmp.eq.s32.totalorder %s29, 5
      %p218 = por %p216, %p217
      %p220 = scmp.ne.s32.totalorder %s203, %s219
      %p221 = scmp.eq.s32.totalorder %s29, 0
      %p222 = por %p220, %p221
      %s223 = ssub.s32 %s33, %s44
      %p224 = scmp.eq.s32.totalorder %s223, 0
      %s226 = sadd.s32 %s225, 1
      %s227 = scalar_select %p224, %s225, %s226
      %p230 = pneg %p224
      %p231 = scmp.eq.s32.totalorder %s23, 5
      %p232 = por %p230, %p231
      %p233 = scmp.ne.s32.totalorder %s225, %s228
      %p234 = scmp.eq.s32.totalorder %s23, 0
      %p235 = por %p233, %p234
      %p236 = scmp.ne.s32.totalorder %s225, %s228
      %p237 = scmp.eq.s32.totalorder %s28, 5
      %p238 = por %p236, %p237
      %p239 = scmp.ne.s32.totalorder %s228, %s229
      %p240 = scmp.eq.s32.totalorder %s28, 0
      %p241 = por %p239, %p240
      %p242 = scmp.ne.s32.totalorder %s228, %s229
      %p243 = scmp.eq.s32.totalorder %s29, 5
      %p244 = por %p242, %p243
      %p246 = scmp.ne.s32.totalorder %s229, %s245
      %p247 = scmp.eq.s32.totalorder %s29, 0
      %p248 = por %p246, %p247
      %s250 = sadd.s32 %s249, 1
      %p253 = scmp.eq.s32.totalorder %s23, 5
      %p254 = scmp.ne.s32.totalorder %s249, %s251
      %p255 = scmp.eq.s32.totalorder %s23, 0
      %p256 = por %p254, %p255
      %p257 = scmp.ne.s32.totalorder %s249, %s251
      %p258 = scmp.eq.s32.totalorder %s28, 5
      %p259 = por %p257, %p258
      %p260 = scmp.ne.s32.totalorder %s251, %s252
      %p261 = scmp.eq.s32.totalorder %s28, 0
      %p262 = por %p260, %p261
      %p263 = scmp.ne.s32.totalorder %s251, %s252
      %p264 = scmp.eq.s32.totalorder %s29, 5
      %p265 = por %p263, %p264
      %p267 = scmp.ne.s32.totalorder %s252, %s266
      %p268 = scmp.eq.s32.totalorder %s29, 0
      %p269 = por %p267, %p268
      %s270 = sadd.s32 %s31, %s32
      %s271 = sadd.s32 %s52, %s48
      %s272 = ssub.s32 %s30, %s56
      %s273 = ssub.s32 %s270, %s271
      %s274 = sor.u32 %s272, %s273
      %s275 = ssub.s32 %s33, %s44
      %s276 = sor.u32 %s274, %s275
      %p277 = scmp.eq.s32.totalorder %s276, 0
      %s279 = sadd.s32 %s278, 1
      %s280 = scalar_select %p277, %s278, %s279
      %p283 = pneg %p277
      %p284 = scmp.eq.s32.totalorder %s23, 5
      %p285 = por %p283, %p284
      %p286 = scmp.ne.s32.totalorder %s278, %s281
      %p287 = scmp.eq.s32.totalorder %s23, 0
      %p288 = por %p286, %p287
      %p289 = scmp.ne.s32.totalorder %s278, %s281
      %p290 = scmp.eq.s32.totalorder %s28, 5
      %p291 = por %p289, %p290
      %p292 = scmp.ne.s32.totalorder %s281, %s282
      %p293 = scmp.eq.s32.totalorder %s28, 0
      %p294 = por %p292, %p293
      %p295 = scmp.ne.s32.totalorder %s281, %s282
      %p296 = scmp.eq.s32.totalorder %s29, 5
      %p297 = por %p295, %p296
      %p299 = scmp.ne.s32.totalorder %s282, %s298
      %p300 = scmp.eq.s32.totalorder %s29, 0
      %p301 = por %p299, %p300
      %p302 = scmp.le.s32.totalorder 1, %s23
      %p303 = scmp.lt.s32.totalorder %s23, 7
      %p304 = pnand %p302, %p303
      %p305 = pneg %p304
      // Predicated region
      $region9: #{tpu_custom_call.1} parent=5 // pred_check
        _
      $region10: #{tpu_custom_call.1} parent=5 // pred_check_branch
        %307 = sbr.rel (%p304) target = $region12
      $region11: #{tpu_custom_call.1} parent=5 // pred_region
        %s308 = ssub.s32 %s23, 1
        // Predicated region
        $region13: #{tpu_custom_call.1} parent=11 // pred_check
          %p309 = pneg %p215
        $region14: #{tpu_custom_call.1} parent=11 // pred_check_branch
          %311 = sbr.rel (%p309) target = $region16
        $region15: #{tpu_custom_call.1} parent=11 // pred_region
          %s312 = smul.u32 2, %s37
          %p313 = scmp.lt.s32.totalorder %s312, 1
          %s314 = scalar_select %p313, %s312, 1
          %s315 = smul.addr %s314, 8
          %s316 = scalar_lea.vmem %s5, %s315
          %s317 = smul.u32 2, %s37
        $region16: #{tpu_custom_call.1} parent=11 // pred_fallthru
          _
        // Predicated region
        $region17: #{tpu_custom_call.1} parent=11 // pred_check
          %p318 = pneg %p241
        $region18: #{tpu_custom_call.1} parent=11 // pred_check_branch
          %320 = sbr.rel (%p318) target = $region20
        $region19: #{tpu_custom_call.1} parent=11 // pred_region
          %s321 = smul.u32 2, %s37
          %p322 = scmp.lt.s32.totalorder %s321, 1
          %s323 = scalar_select %p322, %s321, 1
          %s324 = smul.addr %s323, 8
          %s325 = scalar_lea.vmem %s6, %s324
          %s326 = smul.u32 2, %s37
        $region20: #{tpu_custom_call.1} parent=11 // pred_fallthru
          _
        // Predicated region
        $region21: #{tpu_custom_call.1} parent=11 // pred_check
          %p327 = pneg %p262
        $region22: #{tpu_custom_call.1} parent=11 // pred_check_branch
          %329 = sbr.rel (%p327) target = $region24
        $region23: #{tpu_custom_call.1} parent=11 // pred_region
          _
        $region24: #{tpu_custom_call.1} parent=11 // pred_fallthru
          _
      $region12: #{tpu_custom_call.1} parent=5 // pred_fallthru
        _
      %p330 = scmp.lt.s32.totalorder %s23, 6
      // Predicated region
      $region25: #{tpu_custom_call.1} parent=5 // pred_check
        %p331 = pneg %p330
      $region26: #{tpu_custom_call.1} parent=5 // pred_check_branch
        %333 = sbr.rel (%p331) target = $region28
      $region27: #{tpu_custom_call.1} parent=5 // pred_region
        // Predicated region
        $region29: #{tpu_custom_call.1} parent=27 // pred_check
          %p334 = pneg %p71
        $region30: #{tpu_custom_call.1} parent=27 // pred_check_branch
          %336 = sbr.rel (%p334) target = $region32
        $region31: #{tpu_custom_call.1} parent=27 // pred_region
          %s337 = sand.u32 %s61, 1
          %s338 = scalar_lea.sflag [#allocation3], %s337
          %s339 = sand.u32 %s61, 1
          %s340 = smul.addr %s339, 8
          %s341 = scalar_lea.vmem [#allocation2], %s340
          %s342 = smul.u32 2, %s33
          %s344 = ssub.s32 128, 128
          %345 = vsyncadd %s338, %s344
          %s346 = smul.addr %s30, 2
          %s347 = sadd.s32 %s342, %s346
          %s348 = smul.addr %s347, 64
          %s349 = scalar_lea.hbm %s0, %s348
          %s350 = sshll.u32 %s341, 4
          %s351 = int_to_ptr.vmem [resolvable:$true] %s350
          %356 = dma.hbm_to_vmem [thread:$0]  %s349, 128, %s351, %s338, 64, 64, 4
        $region32: #{tpu_custom_call.1} parent=27 // pred_fallthru
          _
        // Predicated region
        $region33: #{tpu_custom_call.1} parent=27 // pred_check
          %p357 = pneg %p99
        $region34: #{tpu_custom_call.1} parent=27 // pred_check_branch
          %359 = sbr.rel (%p357) target = $region36
        $region35: #{tpu_custom_call.1} parent=27 // pred_region
          %p360 = scmp.lt.s32.totalorder %s31, 2
          %s361 = scalar_select %p360, %s31, 2
          %p362 = scmp.lt.s32.totalorder %s32, 0
          %s363 = scalar_select %p362, %s32, 0
          %s364 = smul.addr %s361, 4
          %s365 = sadd.s32 %s363, %s364
          %s366 = smul.addr %s365, 4
          %s367 = scalar_lea.vmem %s1, %s366
        $region36: #{tpu_custom_call.1} parent=27 // pred_fallthru
          _
        // Predicated region
        $region37: #{tpu_custom_call.1} parent=27 // pred_check
          %p368 = pneg %p127
        $region38: #{tpu_custom_call.1} parent=27 // pred_check_branch
          %370 = sbr.rel (%p368) target = $region40
        $region39: #{tpu_custom_call.1} parent=27 // pred_region
          %s371 = sand.u32 %s23, 1
          %s372 = scalar_lea.sflag [#allocation5], %s371
          %s373 = sand.u32 %s117, 1
          %s374 = scalar_lea.vmem [#allocation4], %s373
          %s376 = ssub.s32 16, 16
          %377 = vsyncadd %s372, %s376
          %s378 = sadd.s32 %s32, %s31
          %s379 = smul.addr %s378, 16
          %s380 = scalar_lea.hbm %s2, %s379
          %s382 = sshll.u32 %s374, 4
          %s383 = int_to_ptr.vmem [resolvable:$true] %s382
          %385 = dma.hbm_to_vmem [thread:$0]  %s380, 16, %s383, %s372
        $region40: #{tpu_custom_call.1} parent=27 // pred_fallthru
          _
        // Predicated region
        $region41: #{tpu_custom_call.1} parent=27 // pred_check
          %p386 = pneg %p155
        $region42: #{tpu_custom_call.1} parent=27 // pred_check_branch
          %388 = sbr.rel (%p386) target = $region44
        $region43: #{tpu_custom_call.1} parent=27 // pred_region
          %s389 = sand.u32 %s23, 1
          %s390 = scalar_lea.sflag [#allocation5], %s389
          %s391 = sand.u32 %s145, 1
          %s392 = scalar_lea.vmem [#allocation6], %s391
          %s394 = ssub.s32 16, 16
          %395 = vsyncadd %s390, %s394
          %s396 = sadd.s32 %s32, %s31
          %s397 = smul.addr %s396, 16
          %s398 = scalar_lea.hbm %s3, %s397
          %s400 = sshll.u32 %s392, 4
          %s401 = int_to_ptr.vmem [resolvable:$true] %s400
          %403 = dma.hbm_to_vmem [thread:$0]  %s398, 16, %s401, %s390
        $region44: #{tpu_custom_call.1} parent=27 // pred_fallthru
          _
        // Predicated region
        $region45: #{tpu_custom_call.1} parent=27 // pred_check
          %p404 = pneg %p183
        $region46: #{tpu_custom_call.1} parent=27 // pred_check_branch
          %406 = sbr.rel (%p404) target = $region48
        $region47: #{tpu_custom_call.1} parent=27 // pred_region
          %s407 = sand.u32 %s173, 1
          %s408 = scalar_lea.sflag [#allocation8], %s407
          %s409 = sand.u32 %s173, 1
          %s410 = scalar_lea.vmem [#allocation7], %s409
          %s412 = ssub.s32 16, 16
          %413 = vsyncadd %s408, %s412
          %s414 = sadd.s32 %s32, %s31
          %s415 = smul.addr %s414, 16
          %s416 = scalar_lea.hbm %s4, %s415
          %s418 = sshll.u32 %s410, 4
          %s419 = int_to_ptr.vmem [resolvable:$true] %s418
          %421 = dma.hbm_to_vmem [thread:$0]  %s416, 16, %s419, %s408
        $region48: #{tpu_custom_call.1} parent=27 // pred_fallthru
          _
      $region28: #{tpu_custom_call.1} parent=5 // pred_fallthru
        _
      %p422 = scmp.le.s32.totalorder 1, %s23
      %p423 = scmp.lt.s32.totalorder %s23, 7
      %p424 = pnand %p422, %p423
      %p425 = pneg %p424
      // Predicated region
      $region49: #{tpu_custom_call.1} parent=5 // pred_check
        _
      $region50: #{tpu_custom_call.1} parent=5 // pred_check_branch
        %427 = sbr.rel (%p424) target = $region52
      $region51: #{tpu_custom_call.1} parent=5 // pred_region
        %s428 = ssub.s32 %s23, 1
        %s429 = sand.u32 %s64, 1
        %s430 = scalar_lea.sflag [#allocation3], %s429
        %s431 = sand.u32 %s64, 1
        %s432 = smul.addr %s431, 8
        %s433 = scalar_lea.vmem [#allocation2], %s432
        // Predicated region
        $region53: #{tpu_custom_call.1} parent=51 // pred_check
          %p434 = pneg %p77
        $region54: #{tpu_custom_call.1} parent=51 // pred_check_branch
          %436 = sbr.rel (%p434) target = $region56
        $region55: #{tpu_custom_call.1} parent=51 // pred_region
          %437 = dma.done %s430, 128
        $region56: #{tpu_custom_call.1} parent=51 // pred_fallthru
          _
        %s438 = sand.u32 %s28, 1
        %s439 = scalar_lea.sflag [#allocation5], %s438
        %s440 = sand.u32 %s120, 1
        %s441 = scalar_lea.vmem [#allocation4], %s440
        // Predicated region
        $region57: #{tpu_custom_call.1} parent=51 // pred_check
          %p442 = pneg %p133
        $region58: #{tpu_custom_call.1} parent=51 // pred_check_branch
          %444 = sbr.rel (%p442) target = $region60
        $region59: #{tpu_custom_call.1} parent=51 // pred_region
          %445 = dma.done %s439, 16
        $region60: #{tpu_custom_call.1} parent=51 // pred_fallthru
          _
        %s446 = sand.u32 %s28, 1
        %s447 = scalar_lea.sflag [#allocation5], %s446
        %s448 = sand.u32 %s148, 1
        %s449 = scalar_lea.vmem [#allocation6], %s448
        // Predicated region
        $region61: #{tpu_custom_call.1} parent=51 // pred_check
          %p450 = pneg %p161
        $region62: #{tpu_custom_call.1} parent=51 // pred_check_branch
          %452 = sbr.rel (%p450) target = $region64
        $region63: #{tpu_custom_call.1} parent=51 // pred_region
          %453 = dma.done %s447, 16
        $region64: #{tpu_custom_call.1} parent=51 // pred_fallthru
          _
        %s454 = sand.u32 %s176, 1
        %s455 = scalar_lea.sflag [#allocation8], %s454
        %s456 = sand.u32 %s176, 1
        %s457 = scalar_lea.vmem [#allocation7], %s456
        // Predicated region
        $region65: #{tpu_custom_call.1} parent=51 // pred_check
          %p458 = pneg %p189
        $region66: #{tpu_custom_call.1} parent=51 // pred_check_branch
          %460 = sbr.rel (%p458) target = $region68
        $region67: #{tpu_custom_call.1} parent=51 // pred_region
          %461 = dma.done %s455, 16
        $region68: #{tpu_custom_call.1} parent=51 // pred_fallthru
          _
        %s462 = sand.u32 %s64, 1
        %s463 = scalar_lea.sflag [#allocation3], %s462
        %s464 = sand.u32 %s64, 1
        %s465 = smul.addr %s464, 8
        %s466 = scalar_lea.vmem [#allocation2], %s465
        %p467 = pneg %p77
        %p468 = pneg %p74
        %p469 = scmp.lt.s32.totalorder %s35, 2
        %s470 = scalar_select %p469, %s35, 2
        %p471 = scmp.lt.s32.totalorder %s36, 0
        %s472 = scalar_select %p471, %s36, 0
        %s473 = smul.addr %s470, 4
        %s474 = sadd.s32 %s472, %s473
        %s475 = smul.addr %s474, 4
        %s476 = scalar_lea.vmem %s1, %s475
        %p477 = pneg %p105
        %p478 = pneg %p102
        %s479 = sand.u32 %s28, 1
        %s480 = scalar_lea.sflag [#allocation5], %s479
        %s481 = sand.u32 %s120, 1
        %s482 = scalar_lea.vmem [#allocation4], %s481
        %p483 = pneg %p133
        %p484 = pneg %p130
        %s485 = sand.u32 %s28, 1
        %s486 = scalar_lea.sflag [#allocation5], %s485
        %s487 = sand.u32 %s148, 1
        %s488 = scalar_lea.vmem [#allocation6], %s487
        %p489 = pneg %p161
        %p490 = pneg %p158
        %s491 = sand.u32 %s176, 1
        %s492 = scalar_lea.sflag [#allocation8], %s491
        %s493 = sand.u32 %s176, 1
        %s494 = scalar_lea.vmem [#allocation7], %s493
        %p495 = pneg %p189
        %p496 = pneg %p186
        %s497 = smul.u32 2, %s37
        %p498 = scmp.lt.s32.totalorder %s497, 1
        %s499 = scalar_select %p498, %s497, 1
        %s500 = smul.addr %s499, 8
        %s501 = scalar_lea.vmem %s5, %s500
        %p502 = pneg %p215
        %p503 = pneg %p212
        %s504 = smul.u32 2, %s37
        %p505 = scmp.lt.s32.totalorder %s504, 1
        %s506 = scalar_select %p505, %s504, 1
        %s507 = smul.addr %s506, 8
        %s508 = scalar_lea.vmem %s6, %s507
        %p509 = pneg %p241
        %p510 = pneg %p238
        %p511 = pneg %p262
        %p512 = pneg %p259
        %p513 = pneg %p294
        %p514 = pneg %p291
        %s515 = sadd.s32 %s35, %s36
        %s516 = smul.u32 4, %s515
        %s517 = smul.u32 2, %s37
        %p518 = scmp.lt.s32.totalorder %s34, 1
        %s519 = scalar_select %p518, %s34, 1
        %p520 = scmp.lt.s32.totalorder %s516, 11
        %s521 = scalar_select %p520, %s516, 11
        %p522 = scmp.lt.s32.totalorder %s517, 1
        %s523 = scalar_select %p522, %s517, 1
        %s524 = smul.addr %s521, 2
        %s525 = sadd.s32 %s523, %s524
        %s526 = smul.addr %s519, 24
        %s527 = sadd.s32 %s525, %s526
        %s528 = smul.addr %s527, 4
        %s529 = scalar_lea.vmem %s8, %s528
        %s530 = smul.u32 2, %s37
        %p531 = scmp.lt.s32.totalorder %s35, 2
        %s532 = scalar_select %p531, %s35, 2
        %p533 = scmp.lt.s32.totalorder %s36, 0
        %s534 = scalar_select %p533, %s36, 0
        %s535 = smul.addr %s532, 4
        %s536 = sadd.s32 %s534, %s535
        %s537 = smul.addr %s536, 4
        %s538 = scalar_lea.vmem %s1, %s537
        %s539 = smul.u32 2, %s37
        %p540 = scmp.lt.s32.totalorder %s539, 1
        %s541 = scalar_select %p540, %s539, 1
        %s542 = smul.addr %s541, 8
        %s543 = scalar_lea.vmem %s5, %s542
        %s544 = smul.u32 2, %s37
        %s545 = smul.u32 2, %s37
        %p546 = scmp.lt.s32.totalorder %s545, 1
        %s547 = scalar_select %p546, %s545, 1
        %s548 = smul.addr %s547, 8
        %s549 = scalar_lea.vmem %s6, %s548
        %s550 = smul.u32 2, %s37
        %s551 = sadd.s32 %s35, %s36
        %s552 = smul.u32 4, %s551
        %s553 = smul.u32 2, %s37
        %p554 = scmp.lt.s32.totalorder %s34, 1
        %s555 = scalar_select %p554, %s34, 1
        %p556 = scmp.lt.s32.totalorder %s552, 11
        %s557 = scalar_select %p556, %s552, 11
        %p558 = scmp.lt.s32.totalorder %s553, 1
        %s559 = scalar_select %p558, %s553, 1
        %s560 = smul.addr %s557, 2
        %s561 = sadd.s32 %s559, %s560
        %s562 = smul.addr %s555, 24
        %s563 = sadd.s32 %s561, %s562
        %s564 = smul.addr %s563, 4
        %s565 = scalar_lea.vmem %s8, %s564
        %s566 = sadd.s32 %s35, %s36
        %s567 = smul.u32 4, %s566
        %s568 = smul.u32 2, %s37
        %v570 = vld [vmem:[%s433] sm:$0xf]
        %v571 = vld [vmem:[%s433 + $0x4] sm:$0xf]
        %v572 = vld [vmem:[%s538] sm:$0xf]
        %v573 = vld [vmem:[%s538 + $0x4] sm:$0xf]
        %v574 = vld [vmem:[%s538 + $0x8] sm:$0xf]
        %v575 = vld [vmem:[%s538 + $0xc] sm:$0xf]
        %v576 = vld [vmem:[%s441] sm:$0x1]
        %v578 = vlaneseq
        %v579 = vshrl.u32 %v578, 7
        %v580 = vsub.s32 0, %v579
        %v581 = vrot.slane %v576, %v580
        %v585 = vunpack.c.l.b16 %v570
        %v586 = vunpack.c.l.b16 %v571
        %v587 = vpack.c.b16 %v586, %v585
        %v592 = vunpack.c.l.b16 %v572
        %v593 = vunpack.c.l.b16 %v573
        %v594 = vunpack.c.l.b16 %v574
        %v595 = vunpack.c.l.b16 %v575
        %v596 = vpack.c.b16 %v593, %v592
        %v597 = vpack.c.b16 %v595, %v594
        %vm600 = vcmask 261120
        %v602 = vsel %vm600, %v587, 0
        %604 = vmatprep.subr.bf16.mxu0 0
        %605 = vmatpush1.bf16.msra.mxu0 %v596
        %606 = vmatprep.subr.bf16.mxu0 0
        %607 = vmatpush1.bf16.msra.mxu0 %v597
        %608 = vmatprep.subr.bf16.mxu0 0
        %609 = vmatpush1.bf16.msra.mxu0 0
        %610 = vmatprep.subr.bf16.mxu0 0
        %611 = vmatpush1.bf16.msra.mxu0 0
        %612 = vmatprep.subr.bf16.mxu0 0
        %613 = vmatpush1.bf16.msra.mxu0 0
        %614 = vmatprep.subr.bf16.mxu0 0
        %615 = vmatpush1.bf16.msra.mxu0 0
        %616 = vmatprep.subr.bf16.mxu0 0
        %617 = vmatpush1.bf16.msra.mxu0 0
        %618 = vmatprep.subr.bf16.mxu0 0
        %619 = vmatpush1.bf16.msra.mxu0 0
        %620 = vmatprep.subr.bf16.mxu0 0
        %621 = vmatpush1.bf16.msra.mxu0 0
        %622 = vmatprep.subr.bf16.mxu0 0
        %623 = vmatpush1.bf16.msra.mxu0 0
        %624 = vmatprep.subr.bf16.mxu0 0
        %625 = vmatpush1.bf16.msra.mxu0 0
        %626 = vmatprep.subr.bf16.mxu0 0
        %627 = vmatpush1.bf16.msra.mxu0 0
        %628 = vmatprep.subr.bf16.mxu0 0
        %629 = vmatpush1.bf16.msra.mxu0 0
        %630 = vmatprep.subr.bf16.mxu0 0
        %631 = vmatpush1.bf16.msra.mxu0 0
        %632 = vmatprep.subr.bf16.mxu0 0
        %633 = vmatpush1.bf16.msra.mxu0 0
        %634 = vmatprep.subr.bf16.mxu0 0
        %635 = vmatpush1.bf16.msra.mxu0 0
        %636 = vmatprep.mubr.bf16.mxu0 0
        %637 = vmatmul.mubr.bf16.gmra.mrb[0].mxu0 %v602
        %v638 = vpop.f32.mrb[0].mxu0
        %v639 = vadd.f32 %v581, %v638
        %v640 = vpop.f32.mrb[0].mxu0
        %v641 = vpop.f32.mrb[0].mxu0
        %v642 = vadd.f32 %v581, %v641
        %v643 = vpop.f32.mrb[0].mxu0
        %644 = vdwg.mxu0
        %p645 = scmp.eq.s32.totalorder %s35, 2
        // Predicated region
        $region69: #{tpu_custom_call.1} parent=51 // pred_check
          %p646 = pneg %p645
        $region70: #{tpu_custom_call.1} parent=51 // pred_check_branch
          %648 = sbr.rel (%p646) target = $region72
        $region71: #{tpu_custom_call.1} parent=51 // pred_region
          %v649 = vpack.c.bf16 %v642, %v639
          %v651 = vunpack.c.l.b16 %v649
          %v652 = vunpack.c.h.b16 %v649
          %v653 = vpack.c.b16 %v651, %v651
          %v654 = vpack.c.b16 %v652, %v652
          %vm657 = vcmask 60416
          %658 = vst.msk [vmem:[%s565] sm:$0xf] %vm657, %v653
          %659 = vst.msk [vmem:[%s565 + $0x4] sm:$0xf] %vm657, %v654
          %660 = vrot.lane.b32.xlu0 %v653, 120
          %v661 = vpop.permute.xlu0 %660
          %662 = vrot.lane.b32.xlu0 %v654, 120
          %v663 = vpop.permute.xlu0 %662
          %s666 = scalar_lea.vmem %s565, 8
          %667 = vst.msk [vmem:[%s666] sm:$0xf] %vm657, %v661
          %668 = vst.msk [vmem:[%s666 + $0x4] sm:$0xf] %vm657, %v663
          %669 = vrot.lane.b32.xlu0 %v653, 112
          %v670 = vpop.permute.xlu0 %669
          %671 = vrot.lane.b32.xlu0 %v654, 112
          %v672 = vpop.permute.xlu0 %671
          %s675 = scalar_lea.vmem %s565, 16
          %676 = vst.msk [vmem:[%s675] sm:$0xf] %vm657, %v670
          %677 = vst.msk [vmem:[%s675 + $0x4] sm:$0xf] %vm657, %v672
          %678 = vrot.lane.b32.xlu0 %v653, 104
          %v679 = vpop.permute.xlu0 %678
          %680 = vrot.lane.b32.xlu0 %v654, 104
          %v681 = vpop.permute.xlu0 %680
          %s684 = scalar_lea.vmem %s565, 24
          %685 = vst.msk [vmem:[%s684] sm:$0xf] %vm657, %v679
          %686 = vst.msk [vmem:[%s684 + $0x4] sm:$0xf] %vm657, %v681
        $region72: #{tpu_custom_call.1} parent=51 // pred_fallthru
          _
        %p687 = scmp.lt.s32.totalorder %s35, 2
        // Predicated region
        $region73: #{tpu_custom_call.1} parent=51 // pred_check
          %p688 = pneg %p687
        $region74: #{tpu_custom_call.1} parent=51 // pred_check_branch
          %690 = sbr.rel (%p688) target = $region76
        $region75: #{tpu_custom_call.1} parent=51 // pred_region
          %v691 = vld [vmem:[%s449] sm:$0x1]
          %v692 = vld [vmem:[%s457] sm:$0x1]
          %v693 = vld [vmem:[%s543] sm:$0xff]
          %v694 = vld [vmem:[%s543 + $0x8] sm:$0xff]
          %v695 = vld [vmem:[%s549] sm:$0xff]
          %v696 = vld [vmem:[%s549 + $0x8] sm:$0xff]
          %v697 = vld [vmem:[%s7] sm:$0xf]
          %vm698 = vcmask 64512
          %v699 = vsel %vm698, %v639, 0.0
          %700 = vadd.xlane.f32.xlu0 %v699
          %v701 = vpop.xlane.xlu0 %700
          %v702 = vsel %vm698, %v642, 0.0
          %703 = vadd.xlane.f32.xlu0 %v702
          %v704 = vpop.xlane.xlu0 %703
          %v705 = vrcp.pop 8.0
          %v706 = vmul.f32 %v701, %v705
          %v707 = vmul.f32 %v704, %v705
          %v708 = vsub.f32 %v639, %v706
          %v709 = vsub.f32 %v642, %v707
          %v710 = vmul.f32 %v708, %v708
          %v711 = vmul.f32 %v709, %v709
          %v712 = vsel %vm698, %v710, 0.0
          %713 = vadd.xlane.f32.xlu0 %v712
          %v714 = vpop.xlane.xlu0 %713
          %v715 = vsel %vm698, %v711, 0.0
          %716 = vadd.xlane.f32.xlu0 %v715
          %v717 = vpop.xlane.xlu0 %716
          %v718 = vmul.f32 %v714, %v705
          %v719 = vmul.f32 %v717, %v705
          %v720 = vadd.f32 %v718, 1e-06
          %v721 = vadd.f32 %v719, 1e-06
          %v722 = vrsqrt.pop %v720
          %v723 = vrsqrt.pop %v721
          %v724 = vmul.f32 %v708, %v722
          %v725 = vmul.f32 %v709, %v723
          %v727 = vlaneseq
          %v728 = vshrl.u32 %v727, 7
          %v729 = vsub.s32 0, %v728
          %v730 = vrot.slane %v691, %v729
          %v732 = vmul.f32 %v724, %v730
          %v733 = vmul.f32 %v725, %v730
          %v735 = vlaneseq
          %v736 = vshrl.u32 %v735, 7
          %v737 = vsub.s32 0, %v736
          %v738 = vrot.slane %v692, %v737
          %v740 = vadd.f32 %v732, %v738
          %v741 = vadd.f32 %v733, %v738
          %v742 = vpack.c.bf16 %v741, %v740
          %v744 = vsel %vm698, %v742, 0
          %vm746 = vcmask 1043456
          %v748 = vsel %vm746, %v697, 0
          %750 = vmatprep.subr.bf16.mxu0 0
          %751 = vmatpush1.bf16.msra.mxu0 %v748
          %752 = vmatprep.subr.bf16.mxu0 0
          %753 = vmatpush1.bf16.msra.mxu0 0
          %754 = vmatprep.subr.bf16.mxu0 0
          %755 = vmatpush1.bf16.msra.mxu0 0
          %756 = vmatprep.subr.bf16.mxu0 0
          %757 = vmatpush1.bf16.msra.mxu0 0
          %758 = vmatprep.subr.bf16.mxu0 0
          %759 = vmatpush1.bf16.msra.mxu0 0
          %760 = vmatprep.subr.bf16.mxu0 0
          %761 = vmatpush1.bf16.msra.mxu0 0
          %762 = vmatprep.subr.bf16.mxu0 0
          %763 = vmatpush1.bf16.msra.mxu0 0
          %764 = vmatprep.subr.bf16.mxu0 0
          %765 = vmatpush1.bf16.msra.mxu0 0
          %766 = vmatprep.subr.bf16.mxu0 0
          %767 = vmatpush1.bf16.msra.mxu0 0
          %768 = vmatprep.subr.bf16.mxu0 0
          %769 = vmatpush1.bf16.msra.mxu0 0
          %770 = vmatprep.subr.bf16.mxu0 0
          %771 = vmatpush1.bf16.msra.mxu0 0
          %772 = vmatprep.subr.bf16.mxu0 0
          %773 = vmatpush1.bf16.msra.mxu0 0
          %774 = vmatprep.subr.bf16.mxu0 0
          %775 = vmatpush1.bf16.msra.mxu0 0
          %776 = vmatprep.subr.bf16.mxu0 0
          %777 = vmatpush1.bf16.msra.mxu0 0
          %778 = vmatprep.subr.bf16.mxu0 0
          %779 = vmatpush1.bf16.msra.mxu0 0
          %780 = vmatprep.subr.bf16.mxu0 0
          %781 = vmatpush1.bf16.msra.mxu0 0
          %782 = vmatprep.mubr.bf16.mxu0 0
          %783 = vmatmul.mubr.bf16.gmra.mrb[0].mxu0 %v744
          %v784 = vpop.f32.mrb[0].mxu0
          %v785 = vadd.f32 0.0, %v784
          %v786 = vpop.f32.mrb[0].mxu0
          %v787 = vpop.f32.mrb[0].mxu0
          %v788 = vadd.f32 0.0, %v787
          %v789 = vpop.f32.mrb[0].mxu0
          %790 = vdwg.mxu0
          %v791 = vmul.f32 %v740, %v693
          %v792 = vmul.f32 %v741, %v694
          %v793 = vmul.f32 %v785, %v695
          %v794 = vmul.f32 %v788, %v696
          %v795 = vadd.f32 %v791, %v793
          %v796 = vadd.f32 %v792, %v794
          %v797 = vpack.c.bf16 %v796, %v795
          %v799 = vunpack.c.l.b16 %v797
          %v800 = vunpack.c.h.b16 %v797
          %v801 = vpack.c.b16 %v799, %v799
          %v802 = vpack.c.b16 %v800, %v800
          %vm805 = vcmask 60416
          %806 = vst.msk [vmem:[%s565] sm:$0xf] %vm805, %v801
          %807 = vst.msk [vmem:[%s565 + $0x4] sm:$0xf] %vm805, %v802
          %810 = vrot.lane.b32.xlu0 %v639, 120
          %v811 = vpop.permute.xlu0 %810
          %812 = vrot.lane.b32.xlu0 %v642, 120
          %v813 = vpop.permute.xlu0 %812
          %v816 = vsel %vm698, %v811, 0.0
          %817 = vadd.xlane.f32.xlu0 %v816
          %v818 = vpop.xlane.xlu0 %817
          %v819 = vsel %vm698, %v813, 0.0
          %820 = vadd.xlane.f32.xlu0 %v819
          %v821 = vpop.xlane.xlu0 %820
          %v822 = vmul.f32 %v818, %v705
          %v823 = vmul.f32 %v821, %v705
          %v824 = vsub.f32 %v639, %v822
          %v825 = vsub.f32 %v642, %v823
          %v826 = vmul.f32 %v824, %v824
          %v827 = vmul.f32 %v825, %v825
          %830 = vrot.lane.b32.xlu0 %v826, 120
          %v831 = vpop.permute.xlu0 %830
          %832 = vrot.lane.b32.xlu0 %v827, 120
          %v833 = vpop.permute.xlu0 %832
          %v836 = vsel %vm698, %v831, 0.0
          %837 = vadd.xlane.f32.xlu0 %v836
          %v838 = vpop.xlane.xlu0 %837
          %v839 = vsel %vm698, %v833, 0.0
          %840 = vadd.xlane.f32.xlu0 %v839
          %v841 = vpop.xlane.xlu0 %840
          %v842 = vmul.f32 %v838, %v705
          %v843 = vmul.f32 %v841, %v705
          %v844 = vadd.f32 %v842, 1e-06
          %v845 = vadd.f32 %v843, 1e-06
          %v846 = vrsqrt.pop %v844
          %v847 = vrsqrt.pop %v845
          %v848 = vmul.f32 %v824, %v846
          %v849 = vmul.f32 %v825, %v847
          %v850 = vmul.f32 %v848, %v730
          %v851 = vmul.f32 %v849, %v730
          %v852 = vadd.f32 %v850, %v738
          %v853 = vadd.f32 %v851, %v738
          %v854 = vpack.c.bf16 %v853, %v852
          %856 = vrot.lane.b32.xlu0 %v854, 120
          %v857 = vpop.permute.xlu0 %856
          %v859 = vsel %vm698, %v857, 0
          %861 = vmatprep.subr.bf16.mxu0 0
          %862 = vmatpush1.bf16.msra.mxu0 %v748
          %863 = vmatprep.subr.bf16.mxu0 0
          %864 = vmatpush1.bf16.msra.mxu0 0
          %865 = vmatprep.subr.bf16.mxu0 0
          %866 = vmatpush1.bf16.msra.mxu0 0
          %867 = vmatprep.subr.bf16.mxu0 0
          %868 = vmatpush1.bf16.msra.mxu0 0
          %869 = vmatprep.subr.bf16.mxu0 0
          %870 = vmatpush1.bf16.msra.mxu0 0
          %871 = vmatprep.subr.bf16.mxu0 0
          %872 = vmatpush1.bf16.msra.mxu0 0
          %873 = vmatprep.subr.bf16.mxu0 0
          %874 = vmatpush1.bf16.msra.mxu0 0
          %875 = vmatprep.subr.bf16.mxu0 0
          %876 = vmatpush1.bf16.msra.mxu0 0
          %877 = vmatprep.subr.bf16.mxu0 0
          %878 = vmatpush1.bf16.msra.mxu0 0
          %879 = vmatprep.subr.bf16.mxu0 0
          %880 = vmatpush1.bf16.msra.mxu0 0
          %881 = vmatprep.subr.bf16.mxu0 0
          %882 = vmatpush1.bf16.msra.mxu0 0
          %883 = vmatprep.subr.bf16.mxu0 0
          %884 = vmatpush1.bf16.msra.mxu0 0
          %885 = vmatprep.subr.bf16.mxu0 0
          %886 = vmatpush1.bf16.msra.mxu0 0
          %887 = vmatprep.subr.bf16.mxu0 0
          %888 = vmatpush1.bf16.msra.mxu0 0
          %889 = vmatprep.subr.bf16.mxu0 0
          %890 = vmatpush1.bf16.msra.mxu0 0
          %891 = vmatprep.subr.bf16.mxu0 0
          %892 = vmatpush1.bf16.msra.mxu0 0
          %893 = vmatprep.mubr.bf16.mxu0 0
          %894 = vmatmul.mubr.bf16.gmra.mrb[0].mxu0 %v859
          %v895 = vpop.f32.mrb[0].mxu0
          %v896 = vadd.f32 0.0, %v895
          %v897 = vpop.f32.mrb[0].mxu0
          %v898 = vpop.f32.mrb[0].mxu0
          %v899 = vadd.f32 0.0, %v898
          %v900 = vpop.f32.mrb[0].mxu0
          %901 = vdwg.mxu0
          %904 = vrot.lane.b32.xlu0 %v693, 8
          %v905 = vpop.permute.xlu0 %904
          %906 = vrot.lane.b32.xlu0 %v694, 8
          %v907 = vpop.permute.xlu0 %906
          %v910 = vmul.f32 %v852, %v905
          %v911 = vmul.f32 %v853, %v907
          %v912 = vmul.f32 %v896, %v695
          %v913 = vmul.f32 %v899, %v696
          %916 = vrot.lane.b32.xlu0 %v912, 8
          %v917 = vpop.permute.xlu0 %916
          %918 = vrot.lane.b32.xlu0 %v913, 8
          %v919 = vpop.permute.xlu0 %918
          %v922 = vadd.f32 %v910, %v917
          %v923 = vadd.f32 %v911, %v919
          %v924 = vpack.c.bf16 %v923, %v922
          %v926 = vunpack.c.l.b16 %v924
          %v927 = vunpack.c.h.b16 %v924
          %v928 = vpack.c.b16 %v926, %v926
          %v929 = vpack.c.b16 %v927, %v927
          %930 = vrot.lane.b32.xlu0 %v928, 120
          %v931 = vpop.permute.xlu0 %930
          %932 = vrot.lane.b32.xlu0 %v929, 120
          %v933 = vpop.permute.xlu0 %932
          %s936 = scalar_lea.vmem %s565, 8
          %937 = vst.msk [vmem:[%s936] sm:$0xf] %vm805, %v931
          %938 = vst.msk [vmem:[%s936 + $0x4] sm:$0xf] %vm805, %v933
          %939 = vrot.lane.b32.xlu0 %v639, 112
          %v940 = vpop.permute.xlu0 %939
          %941 = vrot.lane.b32.xlu0 %v642, 112
          %v942 = vpop.permute.xlu0 %941
          %v945 = vsel %vm698, %v940, 0.0
          %946 = vadd.xlane.f32.xlu0 %v945
          %v947 = vpop.xlane.xlu0 %946
          %v948 = vsel %vm698, %v942, 0.0
          %949 = vadd.xlane.f32.xlu0 %v948
          %v950 = vpop.xlane.xlu0 %949
          %v951 = vmul.f32 %v947, %v705
          %v952 = vmul.f32 %v950, %v705
          %v953 = vsub.f32 %v639, %v951
          %v954 = vsub.f32 %v642, %v952
          %v955 = vmul.f32 %v953, %v953
          %v956 = vmul.f32 %v954, %v954
          %959 = vrot.lane.b32.xlu0 %v955, 112
          %v960 = vpop.permute.xlu0 %959
          %961 = vrot.lane.b32.xlu0 %v956, 112
          %v962 = vpop.permute.xlu0 %961
          %v965 = vsel %vm698, %v960, 0.0
          %966 = vadd.xlane.f32.xlu0 %v965
          %v967 = vpop.xlane.xlu0 %966
          %v968 = vsel %vm698, %v962, 0.0
          %969 = vadd.xlane.f32.xlu0 %v968
          %v970 = vpop.xlane.xlu0 %969
          %v971 = vmul.f32 %v967, %v705
          %v972 = vmul.f32 %v970, %v705
          %v973 = vadd.f32 %v971, 1e-06
          %v974 = vadd.f32 %v972, 1e-06
          %v975 = vrsqrt.pop %v973
          %v976 = vrsqrt.pop %v974
          %v977 = vmul.f32 %v953, %v975
          %v978 = vmul.f32 %v954, %v976
          %v979 = vmul.f32 %v977, %v730
          %v980 = vmul.f32 %v978, %v730
          %v981 = vadd.f32 %v979, %v738
          %v982 = vadd.f32 %v980, %v738
          %v983 = vpack.c.bf16 %v982, %v981
          %985 = vrot.lane.b32.xlu0 %v983, 112
          %v986 = vpop.permute.xlu0 %985
          %v988 = vsel %vm698, %v986, 0
          %990 = vmatprep.subr.bf16.mxu0 0
          %991 = vmatpush1.bf16.msra.mxu0 %v748
          %992 = vmatprep.subr.bf16.mxu0 0
          %993 = vmatpush1.bf16.msra.mxu0 0
          %994 = vmatprep.subr.bf16.mxu0 0
          %995 = vmatpush1.bf16.msra.mxu0 0
          %996 = vmatprep.subr.bf16.mxu0 0
          %997 = vmatpush1.bf16.msra.mxu0 0
          %998 = vmatprep.subr.bf16.mxu0 0
          %999 = vmatpush1.bf16.msra.mxu0 0
          %1000 = vmatprep.subr.bf16.mxu0 0
          %1001 = vmatpush1.bf16.msra.mxu0 0
          %1002 = vmatprep.subr.bf16.mxu0 0
          %1003 = vmatpush1.bf16.msra.mxu0 0
          %1004 = vmatprep.subr.bf16.mxu0 0
          %1005 = vmatpush1.bf16.msra.mxu0 0
          %1006 = vmatprep.subr.bf16.mxu0 0
          %1007 = vmatpush1.bf16.msra.mxu0 0
          %1008 = vmatprep.subr.bf16.mxu0 0
          %1009 = vmatpush1.bf16.msra.mxu0 0
          %1010 = vmatprep.subr.bf16.mxu0 0
          %1011 = vmatpush1.bf16.msra.mxu0 0
          %1012 = vmatprep.subr.bf16.mxu0 0
          %1013 = vmatpush1.bf16.msra.mxu0 0
          %1014 = vmatprep.subr.bf16.mxu0 0
          %1015 = vmatpush1.bf16.msra.mxu0 0
          %1016 = vmatprep.subr.bf16.mxu0 0
          %1017 = vmatpush1.bf16.msra.mxu0 0
          %1018 = vmatprep.subr.bf16.mxu0 0
          %1019 = vmatpush1.bf16.msra.mxu0 0
          %1020 = vmatprep.subr.bf16.mxu0 0
          %1021 = vmatpush1.bf16.msra.mxu0 0
          %1022 = vmatprep.mubr.bf16.mxu0 0
          %1023 = vmatmul.mubr.bf16.gmra.mrb[0].mxu0 %v988
          %v1024 = vpop.f32.mrb[0].mxu0
          %v1025 = vadd.f32 0.0, %v1024
          %v1026 = vpop.f32.mrb[0].mxu0
          %v1027 = vpop.f32.mrb[0].mxu0
          %v1028 = vadd.f32 0.0, %v1027
          %v1029 = vpop.f32.mrb[0].mxu0
          %1030 = vdwg.mxu0
          %1031 = vrot.lane.b32.xlu0 %v693, 16
          %v1032 = vpop.permute.xlu0 %1031
          %1033 = vrot.lane.b32.xlu0 %v694, 16
          %v1034 = vpop.permute.xlu0 %1033
          %v1037 = vmul.f32 %v981, %v1032
          %v1038 = vmul.f32 %v982, %v1034
          %v1039 = vmul.f32 %v1025, %v695
          %v1040 = vmul.f32 %v1028, %v696
          %1043 = vrot.lane.b32.xlu0 %v1039, 16
          %v1044 = vpop.permute.xlu0 %1043
          %1045 = vrot.lane.b32.xlu0 %v1040, 16
          %v1046 = vpop.permute.xlu0 %1045
          %v1049 = vadd.f32 %v1037, %v1044
          %v1050 = vadd.f32 %v1038, %v1046
          %v1051 = vpack.c.bf16 %v1050, %v1049
          %v1053 = vunpack.c.l.b16 %v1051
          %v1054 = vunpack.c.h.b16 %v1051
          %v1055 = vpack.c.b16 %v1053, %v1053
          %v1056 = vpack.c.b16 %v1054, %v1054
          %1057 = vrot.lane.b32.xlu0 %v1055, 112
          %v1058 = vpop.permute.xlu0 %1057
          %1059 = vrot.lane.b32.xlu0 %v1056, 112
          %v1060 = vpop.permute.xlu0 %1059
          %s1063 = scalar_lea.vmem %s565, 16
          %1064 = vst.msk [vmem:[%s1063] sm:$0xf] %vm805, %v1058
          %1065 = vst.msk [vmem:[%s1063 + $0x4] sm:$0xf] %vm805, %v1060
          %1066 = vrot.lane.b32.xlu0 %v639, 104
          %v1067 = vpop.permute.xlu0 %1066
          %1068 = vrot.lane.b32.xlu0 %v642, 104
          %v1069 = vpop.permute.xlu0 %1068
          %v1072 = vsel %vm698, %v1067, 0.0
          %1073 = vadd.xlane.f32.xlu0 %v1072
          %v1074 = vpop.xlane.xlu0 %1073
          %v1075 = vsel %vm698, %v1069, 0.0
          %1076 = vadd.xlane.f32.xlu0 %v1075
          %v1077 = vpop.xlane.xlu0 %1076
          %v1078 = vmul.f32 %v1074, %v705
          %v1079 = vmul.f32 %v1077, %v705
          %v1080 = vsub.f32 %v639, %v1078
          %v1081 = vsub.f32 %v642, %v1079
          %v1082 = vmul.f32 %v1080, %v1080
          %v1083 = vmul.f32 %v1081, %v1081
          %1086 = vrot.lane.b32.xlu0 %v1082, 104
          %v1087 = vpop.permute.xlu0 %1086
          %1088 = vrot.lane.b32.xlu0 %v1083, 104
          %v1089 = vpop.permute.xlu0 %1088
          %v1092 = vsel %vm698, %v1087, 0.0
          %1093 = vadd.xlane.f32.xlu0 %v1092
          %v1094 = vpop.xlane.xlu0 %1093
          %v1095 = vsel %vm698, %v1089, 0.0
          %1096 = vadd.xlane.f32.xlu0 %v1095
          %v1097 = vpop.xlane.xlu0 %1096
          %v1098 = vmul.f32 %v1094, %v705
          %v1099 = vmul.f32 %v1097, %v705
          %v1100 = vadd.f32 %v1098, 1e-06
          %v1101 = vadd.f32 %v1099, 1e-06
          %v1102 = vrsqrt.pop %v1100
          %v1103 = vrsqrt.pop %v1101
          %v1104 = vmul.f32 %v1080, %v1102
          %v1105 = vmul.f32 %v1081, %v1103
          %v1106 = vmul.f32 %v1104, %v730
          %v1107 = vmul.f32 %v1105, %v730
          %v1108 = vadd.f32 %v1106, %v738
          %v1109 = vadd.f32 %v1107, %v738
          %v1110 = vpack.c.bf16 %v1109, %v1108
          %1112 = vrot.lane.b32.xlu0 %v1110, 104
          %v1113 = vpop.permute.xlu0 %1112
          %v1115 = vsel %vm698, %v1113, 0
          %1117 = vmatprep.subr.bf16.mxu0 0
          %1118 = vmatpush1.bf16.msra.mxu0 %v748
          %1119 = vmatprep.subr.bf16.mxu0 0
          %1120 = vmatpush1.bf16.msra.mxu0 0
          %1121 = vmatprep.subr.bf16.mxu0 0
          %1122 = vmatpush1.bf16.msra.mxu0 0
          %1123 = vmatprep.subr.bf16.mxu0 0
          %1124 = vmatpush1.bf16.msra.mxu0 0
          %1125 = vmatprep.subr.bf16.mxu0 0
          %1126 = vmatpush1.bf16.msra.mxu0 0
          %1127 = vmatprep.subr.bf16.mxu0 0
          %1128 = vmatpush1.bf16.msra.mxu0 0
          %1129 = vmatprep.subr.bf16.mxu0 0
          %1130 = vmatpush1.bf16.msra.mxu0 0
          %1131 = vmatprep.subr.bf16.mxu0 0
          %1132 = vmatpush1.bf16.msra.mxu0 0
          %1133 = vmatprep.subr.bf16.mxu0 0
          %1134 = vmatpush1.bf16.msra.mxu0 0
          %1135 = vmatprep.subr.bf16.mxu0 0
          %1136 = vmatpush1.bf16.msra.mxu0 0
          %1137 = vmatprep.subr.bf16.mxu0 0
          %1138 = vmatpush1.bf16.msra.mxu0 0
          %1139 = vmatprep.subr.bf16.mxu0 0
          %1140 = vmatpush1.bf16.msra.mxu0 0
          %1141 = vmatprep.subr.bf16.mxu0 0
          %1142 = vmatpush1.bf16.msra.mxu0 0
          %1143 = vmatprep.subr.bf16.mxu0 0
          %1144 = vmatpush1.bf16.msra.mxu0 0
          %1145 = vmatprep.subr.bf16.mxu0 0
          %1146 = vmatpush1.bf16.msra.mxu0 0
          %1147 = vmatprep.subr.bf16.mxu0 0
          %1148 = vmatpush1.bf16.msra.mxu0 0
          %1149 = vmatprep.mubr.bf16.mxu0 0
          %1150 = vmatmul.mubr.bf16.gmra.mrb[0].mxu0 %v1115
          %v1151 = vpop.f32.mrb[0].mxu0
          %v1152 = vadd.f32 0.0, %v1151
          %v1153 = vpop.f32.mrb[0].mxu0
          %v1154 = vpop.f32.mrb[0].mxu0
          %v1155 = vadd.f32 0.0, %v1154
          %v1156 = vpop.f32.mrb[0].mxu0
          %1157 = vdwg.mxu0
          %1158 = vrot.lane.b32.xlu0 %v693, 24
          %v1159 = vpop.permute.xlu0 %1158
          %1160 = vrot.lane.b32.xlu0 %v694, 24
          %v1161 = vpop.permute.xlu0 %1160
          %v1164 = vmul.f32 %v1108, %v1159
          %v1165 = vmul.f32 %v1109, %v1161
          %v1166 = vmul.f32 %v1152, %v695
          %v1167 = vmul.f32 %v1155, %v696
          %1170 = vrot.lane.b32.xlu0 %v1166, 24
          %v1171 = vpop.permute.xlu0 %1170
          %1172 = vrot.lane.b32.xlu0 %v1167, 24
          %v1173 = vpop.permute.xlu0 %1172
          %v1176 = vadd.f32 %v1164, %v1171
          %v1177 = vadd.f32 %v1165, %v1173
          %v1178 = vpack.c.bf16 %v1177, %v1176
          %v1180 = vunpack.c.l.b16 %v1178
          %v1181 = vunpack.c.h.b16 %v1178
          %v1182 = vpack.c.b16 %v1180, %v1180
          %v1183 = vpack.c.b16 %v1181, %v1181
          %1184 = vrot.lane.b32.xlu0 %v1182, 104
          %v1185 = vpop.permute.xlu0 %1184
          %1186 = vrot.lane.b32.xlu0 %v1183, 104
          %v1187 = vpop.permute.xlu0 %1186
          %s1190 = scalar_lea.vmem %s565, 24
          %1191 = vst.msk [vmem:[%s1190] sm:$0xf] %vm805, %v1185
          %1192 = vst.msk [vmem:[%s1190 + $0x4] sm:$0xf] %vm805, %v1187
        $region76: #{tpu_custom_call.1} parent=51 // pred_fallthru
          _
        %s1193 = sadd.s32 %s35, %s36
        %s1194 = smul.u32 4, %s1193
        %s1195 = smul.u32 2, %s37
        %p1196 = scmp.lt.s32.totalorder %s34, 1
        %s1197 = scalar_select %p1196, %s34, 1
        %p1198 = scmp.lt.s32.totalorder %s1194, 11
        %s1199 = scalar_select %p1198, %s1194, 11
        %p1200 = scmp.lt.s32.totalorder %s1195, 1
        %s1201 = scalar_select %p1200, %s1195, 1
        %s1202 = smul.addr %s1199, 2
        %s1203 = sadd.s32 %s1201, %s1202
        %s1204 = smul.addr %s1197, 24
        %s1205 = sadd.s32 %s1203, %s1204
        %s1206 = smul.addr %s1205, 4
        %s1207 = scalar_lea.vmem %s8, %s1206
        // Predicated region
        $region77: #{tpu_custom_call.1} parent=51 // pred_check
          %p1208 = pneg %p291
        $region78: #{tpu_custom_call.1} parent=51 // pred_check_branch
          %1210 = sbr.rel (%p1208) target = $region80
        $region79: #{tpu_custom_call.1} parent=51 // pred_region
          %s1211 = sadd.s32 %s35, %s36
          %s1212 = smul.u32 4, %s1211
          %s1213 = smul.u32 2, %s37
        $region80: #{tpu_custom_call.1} parent=51 // pred_fallthru
          _
      $region52: #{tpu_custom_call.1} parent=5 // pred_fallthru
        _
      %p1214 = scmp.le.s32.totalorder 2, %s23
      // Predicated region
      $region81: #{tpu_custom_call.1} parent=5 // pred_check
        %p1215 = pneg %p1214
      $region82: #{tpu_custom_call.1} parent=5 // pred_check_branch
        %1217 = sbr.rel (%p1215) target = $region84
      $region83: #{tpu_custom_call.1} parent=5 // pred_region
        %s1218 = ssub.s32 %s23, 2
        // Predicated region
        $region85: #{tpu_custom_call.1} parent=83 // pred_check
          %p1219 = pneg %p297
        $region86: #{tpu_custom_call.1} parent=83 // pred_check_branch
          %1221 = sbr.rel (%p1219) target = $region88
        $region87: #{tpu_custom_call.1} parent=83 // pred_region
          %s1222 = sadd.s32 %s39, %s40
          %s1223 = smul.u32 4, %s1222
          %s1224 = smul.u32 2, %s41
          %p1225 = scmp.lt.s32.totalorder %s38, 1
          %s1226 = scalar_select %p1225, %s38, 1
          %p1227 = scmp.lt.s32.totalorder %s1223, 11
          %s1228 = scalar_select %p1227, %s1223, 11
          %p1229 = scmp.lt.s32.totalorder %s1224, 1
          %s1230 = scalar_select %p1229, %s1224, 1
          %s1231 = smul.addr %s1228, 2
          %s1232 = sadd.s32 %s1230, %s1231
          %s1233 = smul.addr %s1226, 24
          %s1234 = sadd.s32 %s1232, %s1233
          %s1235 = smul.addr %s1234, 4
          %s1236 = scalar_lea.vmem %s8, %s1235
        $region88: #{tpu_custom_call.1} parent=83 // pred_fallthru
          _
      $region84: #{tpu_custom_call.1} parent=5 // pred_fallthru
        _
    $region6: #{tpu_custom_call.1} parent=1 // loop_footer
      %s27 = sadd.s32 1, %s23
    $region7: #{tpu_custom_call.1} parent=1 // loop_footer_branch
      %22 = sbr.rel target = $region3
    $region8: #{tpu_custom_call.1} parent=1 // loop_exit
      _
    %1237 = vsyncpa [#allocation3], 1
    %s1238 = scalar_lea.sflag [#allocation3], 1
    %1239 = vsyncpa %s1238, 1
    %1240 = vsyncpa [#allocation5], 1
    %s1241 = scalar_lea.sflag [#allocation5], 1
    %1242 = vsyncpa %s1241, 1
    %1243 = vsyncpa [#allocation8], 1
    %s1244 = scalar_lea.sflag [#allocation8], 1
    %1245 = vsyncpa %s1244, 1

</llo_original>
